<compile_context>
chip_gen: v5e
topology: v5e:2x2
jax: 0.10.0
libtpu: 0.0.40
codegen_flags: <defaults>
</compile_context>

<pallas_src>
import math
import functools

import jax
import jax.numpy as jnp
from jax.experimental import pallas as pl
from jax.experimental.pallas import tpu as pltpu

# ----- model hyperparameters (small, consistent with the module __init__) -----
HIDDEN_DIM = 32
PROJECTION_DIM = 64
N_HEADS = 2
HEAD_DIM = 16                      # n_heads * head_dim == hidden_dim
DROPOUT_RATE = 0.1                 # identity at inference
DROPATT_RATE = 0.1                 # identity at inference
PRE_LNORM = False                  # post-layernorm path
LN_EPS = 1e-5

B, T, M = 2, 8, 4                  # batch, query seq len, memory len
S = T + M                          # key/value seq len (mem ++ x)


# ------------------------------ fused kernel ----------------------------------
def transformer_block_kernel(x_ref, mem_ref, wqkv_ref, wo_ref,
                             ln1_g_ref, ln1_b_ref,
                             w1_ref, b1_ref, w2_ref, b2_ref,
                             ln2_g_ref, ln2_b_ref,
                             o_ref, *, batch, q_len, mem_len, n_heads, head_dim):
    """Fused MHA + residual + LN1 + FF + residual + LN2 over the flattened batch.

    x_ref:   (B*T, H)   queries (flattened batch)
    mem_ref: (B*M, H)   memory  (flattened batch)
    o_ref:   (B*T, H)   output
    """
    H = x_ref.shape[-1]
    D = n_heads * head_dim
    scale = 1.0 / math.sqrt(head_dim)

    # weights: bf16 operands, f32 MXU accumulation; biases / LN params stay f32
    wqkv = wqkv_ref[...]                       # (H, 3D)  bf16
    wo = wo_ref[...]                           # (D, H)   bf16
    w1 = w1_ref[...]                           # (H, P)   bf16
    w2 = w2_ref[...]                           # (P, H)   bf16
    b1 = b1_ref[0]                             # (P,)     f32
    b2 = b2_ref[0]                             # (H,)     f32
    g1, be1 = ln1_g_ref[0], ln1_b_ref[0]
    g2, be2 = ln2_g_ref[0], ln2_b_ref[0]

    x2d = x_ref[...].astype(jnp.float32)       # (B*T, H)
    m2d = mem_ref[...].astype(jnp.float32)     # (B*M, H)

    # One fused QKV projection for the whole (flattened) batch:
    # q/k/v for x rows, k/v for memory rows.
    qkv_x = jnp.dot(x2d.astype(jnp.bfloat16), wqkv,
                    preferred_element_type=jnp.float32)       # (B*T, 3D)
    qkv_m = jnp.dot(m2d.astype(jnp.bfloat16), wqkv,
                    preferred_element_type=jnp.float32)       # (B*M, 3D)

    # causal mask for the x->x score block (memory keys are never masked):
    # query i may attend to x positions j <= i. Generated in-kernel, no mask DMA.
    row = jax.lax.broadcasted_iota(jnp.int32, (q_len, q_len), 0)
    col = jax.lax.broadcasted_iota(jnp.int32, (q_len, q_len), 1)
    causal_masked = col > row                  # (T, T) bool

    attn_rows = []
    for b in range(batch):                     # B=2: static unroll, single grid step
        xr = slice(b * q_len, (b + 1) * q_len)        # this batch's x rows
        mr = slice(b * mem_len, (b + 1) * mem_len)    # this batch's memory rows

        attn_b = jnp.zeros((q_len, H), jnp.float32)
        for h in range(n_heads):               # static unroll over heads
            lo = h * head_dim
            q_h = qkv_x[xr, lo:lo + head_dim] * scale             # (T, hd), scale folded
            kx_h = qkv_x[xr, D + lo:D + lo + head_dim]            # (T, hd)
            vx_h = qkv_x[xr, 2 * D + lo:2 * D + lo + head_dim]    # (T, hd)
            km_h = qkv_m[mr, D + lo:D + lo + head_dim]            # (M, hd)
            vm_h = qkv_m[mr, 2 * D + lo:2 * D + lo + head_dim]    # (M, hd)

            # scores vs. memory keys (unmasked) and x keys (causal); exact joint
            # softmax over [mem, x] without ever materializing the concat
            s_m = jnp.dot(q_h, km_h.T, preferred_element_type=jnp.float32)   # (T, M)
            s_x = jnp.dot(q_h, kx_h.T, preferred_element_type=jnp.float32)   # (T, T)
            s_x = jnp.where(causal_masked, -1e30, s_x)

            m_row = jnp.maximum(jnp.max(s_m, axis=-1, keepdims=True),
                                jnp.max(s_x, axis=-1, keepdims=True))
            p_m = jnp.exp(s_m - m_row)
            p_x = jnp.exp(s_x - m_row)
            denom = (jnp.sum(p_m, axis=-1, keepdims=True)
                     + jnp.sum(p_x, axis=-1, keepdims=True))
            inv = pl.reciprocal(denom, approx=True)               # EUP slot

            ctx_h = (jnp.dot(p_m, vm_h, preferred_element_type=jnp.float32)
                     + jnp.dot(p_x, vx_h, preferred_element_type=jnp.float32)) * inv

            # accumulate per-head output projection (replaces ctx concat + big dot)
            attn_b = attn_b + jnp.dot(
                ctx_h.astype(jnp.bfloat16), wo[lo:lo + head_dim, :],
                preferred_element_type=jnp.float32)               # (T, H)
        attn_rows.append(attn_b)

    # T = 8 rows per batch = exactly one f32 sublane tile -> cheap, aligned concat
    attn_out = attn_rows[0] if batch == 1 else jnp.concatenate(attn_rows, axis=0)

    # residual + post-LayerNorm 1 (whole flattened batch at once)
    res = x2d + attn_out                                          # (B*T, H)
    mu = jnp.mean(res, axis=-1, keepdims=True)
    var = jnp.mean((res - mu) ** 2, axis=-1, keepdims=True)
    y = (res - mu) * jax.lax.rsqrt(var + LN_EPS) * g1 + be1

    # Residual FF: Linear -> ReLU -> Linear, residual, post-LayerNorm 2
    h1 = jnp.dot(y.astype(jnp.bfloat16), w1,
                 preferred_element_type=jnp.float32) + b1         # (B*T, P)
    h1 = jnp.maximum(h1, 0.0)
    ff = jnp.dot(h1.astype(jnp.bfloat16), w2,
                 preferred_element_type=jnp.float32) + b2         # (B*T, H)
    res2 = y + ff
    mu2 = jnp.mean(res2, axis=-1, keepdims=True)
    var2 = jnp.mean((res2 - mu2) ** 2, axis=-1, keepdims=True)
    z = (res2 - mu2) * jax.lax.rsqrt(var2 + LN_EPS) * g2 + be2

    o_ref[...] = z.astype(o_ref.dtype)


# -------------------------------- wrapper --------------------------------------
def transformer_block(x, mem, params):
    """x: (B, T, H), mem: (B, M, H). Batch is flattened in the wrapper (free HBM
    reshape) so the kernel sees lane-friendly 2-D slabs and runs every projection /
    LN / residual once over all B*T rows. The whole problem (~20 KB) fits in VMEM,
    so a single un-gridded pallas_call with whole-array (default) blocks is used:
    one launch, one DMA per operand, no pipeline double-buffering."""
    Bx, Tx, H = x.shape
    Mx = mem.shape[1]
    x2d = x.reshape(Bx * Tx, H)
    mem2d = mem.reshape(Bx * Mx, H)
    out2d = pl.pallas_call(
        functools.partial(transformer_block_kernel,
                          batch=Bx, q_len=Tx, mem_len=Mx,
                          n_heads=N_HEADS, head_dim=HEAD_DIM),
        out_shape=jax.ShapeDtypeStruct((Bx * Tx, H), jnp.float32),
        compiler_params=pltpu.CompilerParams(vmem_limit_bytes=32 * 1024 * 1024),
    )(x2d, mem2d,
      params["wqkv"], params["wo"], params["ln1_g"], params["ln1_b"],
      params["w1"], params["b1"], params["w2"], params["b2"],
      params["ln2_g"], params["ln2_b"])
    return out2d.reshape(Bx, Tx, H)


# ----------------------- pure-JAX reference (for checking) ---------------------
def _layer_norm(v, g, b):
    mu = jnp.mean(v, axis=-1, keepdims=True)
    var = jnp.mean((v - mu) ** 2, axis=-1, keepdims=True)
    return (v - mu) * jax.lax.rsqrt(var + LN_EPS) * g + b


def transformer_block_ref(x, mem, params):
    Bx, Tx, H = x.shape
    Mx = mem.shape[1]
    D = N_HEADS * HEAD_DIM
    wqkv = params["wqkv"].astype(jnp.float32)
    wo = params["wo"].astype(jnp.float32)
    w1 = params["w1"].astype(jnp.float32)
    w2 = params["w2"].astype(jnp.float32)

    c = jnp.concatenate([mem, x], axis=1)                          # (B, S, H)
    Sx = c.shape[1]
    qkv = jnp.einsum("bsh,hd->bsd", c, wqkv)
    q = qkv[:, Mx:, :D].reshape(Bx, Tx, N_HEADS, HEAD_DIM)
    k = qkv[:, :, D:2 * D].reshape(Bx, Sx, N_HEADS, HEAD_DIM)
    v = qkv[:, :, 2 * D:].reshape(Bx, Sx, N_HEADS, HEAD_DIM)
    s = jnp.einsum("bthd,bshd->bhts", q, k) / math.sqrt(HEAD_DIM)
    masked = (jnp.arange(Sx)[None, :] - Mx) > jnp.arange(Tx)[:, None]
    s = jnp.where(masked[None, None], -1e30, s)
    p = jax.nn.softmax(s, axis=-1)
    ctx = jnp.einsum("bhts,bshd->bthd", p, v).reshape(Bx, Tx, D)
    y = _layer_norm(x + ctx @ wo, params["ln1_g"], params["ln1_b"])
    h1 = jnp.maximum(jnp.einsum("bth,hp->btp", y, w1) + params["b1"], 0.0)
    ff = jnp.einsum("btp,ph->bth", h1, w2) + params["b2"]
    return _layer_norm(y + ff, params["ln2_g"], params["ln2_b"])


# ---------------------------- param / input setup -------------------------------
def init_params(key):
    D = N_HEADS * HEAD_DIM
    ks = jax.random.split(key, 6)
    scale = 0.05
    wq = scale * jax.random.normal(ks[0], (HIDDEN_DIM, D), jnp.float32)
    wk = scale * jax.random.normal(ks[1], (HIDDEN_DIM, D), jnp.float32)
    wv = scale * jax.random.normal(ks[2], (HIDDEN_DIM, D), jnp.float32)
    return {
        # fused QKV weight, stored bf16 (half the weight DMA, MXU-native operands)
        "wqkv": jnp.concatenate([wq, wk, wv], axis=1).astype(jnp.bfloat16),
        "wo": (scale * jax.random.normal(ks[3], (D, HIDDEN_DIM), jnp.float32)
               ).astype(jnp.bfloat16),
        "ln1_g": jnp.ones((1, HIDDEN_DIM), jnp.float32),
        "ln1_b": jnp.zeros((1, HIDDEN_DIM), jnp.float32),
        "w1": (scale * jax.random.normal(ks[4], (HIDDEN_DIM, PROJECTION_DIM),
                                         jnp.float32)).astype(jnp.bfloat16),
        "b1": jnp.zeros((1, PROJECTION_DIM), jnp.float32),
        "w2": (scale * jax.random.normal(ks[5], (PROJECTION_DIM, HIDDEN_DIM),
                                         jnp.float32)).astype(jnp.bfloat16),
        "b2": jnp.zeros((1, HIDDEN_DIM), jnp.float32),
        "ln2_g": jnp.ones((1, HIDDEN_DIM), jnp.float32),
        "ln2_b": jnp.zeros((1, HIDDEN_DIM), jnp.float32),
    }


if __name__ == "__main__":
    key = jax.random.PRNGKey(0)
    kx, km, kp = jax.random.split(key, 3)

    x = jax.random.normal(kx, (B, T, HIDDEN_DIM), jnp.float32)
    mem = jax.random.normal(km, (B, M, HIDDEN_DIM), jnp.float32)
    params = init_params(kp)

    out = transformer_block(x, mem, params)
    out = jax.block_until_ready(out)

    assert out.shape == (B, T, HIDDEN_DIM)
    assert jnp.all(jnp.isfinite(out))

    # numerical check against a pure-JAX f32 reference (bf16 weights upcast);
    # generous tolerance covers bf16 activation rounding + approx reciprocal.
    ref = transformer_block_ref(x, mem, params)
    max_err = float(jnp.max(jnp.abs(out - ref)))
    assert max_err < 0.1, f"max abs error vs reference: {max_err}"

    print("KERNEL_OK")
</pallas_src>

<mosaic_0001>
module attributes {stable_mosaic.version = 11 : i64} {
  func.func @transformer_block_kernel(%arg0: memref<16x32xf32, #tpu.memory_space<vmem>>, %arg1: memref<8x32xf32, #tpu.memory_space<vmem>>, %arg2: memref<32x96xbf16, #tpu.memory_space<vmem>>, %arg3: memref<32x32xbf16, #tpu.memory_space<vmem>>, %arg4: memref<1x32xf32, #tpu.memory_space<vmem>>, %arg5: memref<1x32xf32, #tpu.memory_space<vmem>>, %arg6: memref<32x64xbf16, #tpu.memory_space<vmem>>, %arg7: memref<1x64xf32, #tpu.memory_space<vmem>>, %arg8: memref<64x32xbf16, #tpu.memory_space<vmem>>, %arg9: memref<1x32xf32, #tpu.memory_space<vmem>>, %arg10: memref<1x32xf32, #tpu.memory_space<vmem>>, %arg11: memref<1x32xf32, #tpu.memory_space<vmem>>, %arg12: memref<16x32xf32, #tpu.memory_space<vmem>>) attributes {dimension_semantics = [], scalar_prefetch = 0 : i64, scratch_operands = 0 : i64, tpu.core_type = #tpu.core_type<tc>} {
    %c0 = arith.constant 0 : index
    %c0_0 = arith.constant 0 : index
    %0 = vector.load %arg2[%c0, %c0_0] : memref<32x96xbf16, #tpu.memory_space<vmem>>, vector<32x96xbf16>
    %c0_1 = arith.constant 0 : index
    %c0_2 = arith.constant 0 : index
    %1 = vector.load %arg3[%c0_1, %c0_2] : memref<32x32xbf16, #tpu.memory_space<vmem>>, vector<32x32xbf16>
    %c0_3 = arith.constant 0 : index
    %c0_4 = arith.constant 0 : index
    %2 = vector.load %arg6[%c0_3, %c0_4] : memref<32x64xbf16, #tpu.memory_space<vmem>>, vector<32x64xbf16>
    %c0_5 = arith.constant 0 : index
    %c0_6 = arith.constant 0 : index
    %3 = vector.load %arg8[%c0_5, %c0_6] : memref<64x32xbf16, #tpu.memory_space<vmem>>, vector<64x32xbf16>
    %c0_7 = arith.constant 0 : index
    %c0_8 = arith.constant 0 : index
    %4 = vector.load %arg7[%c0_7, %c0_8] : memref<1x64xf32, #tpu.memory_space<vmem>>, vector<1x64xf32>
    %5 = vector.shape_cast %4 : vector<1x64xf32> to vector<64xf32>
    %c0_9 = arith.constant 0 : index
    %c0_10 = arith.constant 0 : index
    %6 = vector.load %arg9[%c0_9, %c0_10] : memref<1x32xf32, #tpu.memory_space<vmem>>, vector<1x32xf32>
    %7 = vector.shape_cast %6 : vector<1x32xf32> to vector<32xf32>
    %c0_11 = arith.constant 0 : index
    %c0_12 = arith.constant 0 : index
    %8 = vector.load %arg4[%c0_11, %c0_12] : memref<1x32xf32, #tpu.memory_space<vmem>>, vector<1x32xf32>
    %9 = vector.shape_cast %8 : vector<1x32xf32> to vector<32xf32>
    %c0_13 = arith.constant 0 : index
    %c0_14 = arith.constant 0 : index
    %10 = vector.load %arg5[%c0_13, %c0_14] : memref<1x32xf32, #tpu.memory_space<vmem>>, vector<1x32xf32>
    %11 = vector.shape_cast %10 : vector<1x32xf32> to vector<32xf32>
    %c0_15 = arith.constant 0 : index
    %c0_16 = arith.constant 0 : index
    %12 = vector.load %arg10[%c0_15, %c0_16] : memref<1x32xf32, #tpu.memory_space<vmem>>, vector<1x32xf32>
    %13 = vector.shape_cast %12 : vector<1x32xf32> to vector<32xf32>
    %c0_17 = arith.constant 0 : index
    %c0_18 = arith.constant 0 : index
    %14 = vector.load %arg11[%c0_17, %c0_18] : memref<1x32xf32, #tpu.memory_space<vmem>>, vector<1x32xf32>
    %15 = vector.shape_cast %14 : vector<1x32xf32> to vector<32xf32>
    %c0_19 = arith.constant 0 : index
    %c0_20 = arith.constant 0 : index
    %16 = vector.load %arg0[%c0_19, %c0_20] : memref<16x32xf32, #tpu.memory_space<vmem>>, vector<16x32xf32>
    %c0_21 = arith.constant 0 : index
    %c0_22 = arith.constant 0 : index
    %17 = vector.load %arg1[%c0_21, %c0_22] : memref<8x32xf32, #tpu.memory_space<vmem>>, vector<8x32xf32>
    %18 = arith.truncf %16 : vector<16x32xf32> to vector<16x32xbf16>
    %cst = arith.constant dense<0.000000e+00> : vector<16x96xf32>
    %19 = tpu.matmul %18, %0, %cst {dimension_numbers = #tpu.dot_dimension_numbers<[1], [0], [0], [1], [0, 0, 1, 1], [], []>} : vector<16x32xbf16>, vector<32x96xbf16>, vector<16x96xf32> -> vector<16x96xf32>
    %20 = arith.truncf %17 : vector<8x32xf32> to vector<8x32xbf16>
    %cst_23 = arith.constant dense<0.000000e+00> : vector<8x96xf32>
    %21 = tpu.matmul %20, %0, %cst_23 {dimension_numbers = #tpu.dot_dimension_numbers<[1], [0], [0], [1], [0, 0, 1, 1], [], []>} : vector<8x32xbf16>, vector<32x96xbf16>, vector<8x96xf32> -> vector<8x96xf32>
    %22 = tpu.iota {dimensions = array<i32: 0>} : vector<8x8xi32>
    %23 = tpu.iota {dimensions = array<i32: 1>} : vector<8x8xi32>
    %24 = arith.cmpi sgt, %23, %22 : vector<8x8xi32>
    %cst_24 = arith.constant 0.000000e+00 : f32
    %25 = vector.broadcast %cst_24 : f32 to vector<8x32xf32>
    %26 = vector.extract_strided_slice %19 {offsets = [0, 0], sizes = [8, 16], strides = [1, 1]} : vector<16x96xf32> to vector<8x16xf32>
    %cst_25 = arith.constant 2.500000e-01 : f32
    %27 = vector.broadcast %cst_25 : f32 to vector<8x16xf32>
    %28 = arith.mulf %26, %27 : vector<8x16xf32>
    %29 = vector.extract_strided_slice %19 {offsets = [0, 32], sizes = [8, 16], strides = [1, 1]} : vector<16x96xf32> to vector<8x16xf32>
    %30 = vector.extract_strided_slice %19 {offsets = [0, 64], sizes = [8, 16], strides = [1, 1]} : vector<16x96xf32> to vector<8x16xf32>
    %31 = vector.extract_strided_slice %21 {offsets = [0, 32], sizes = [4, 16], strides = [1, 1]} : vector<8x96xf32> to vector<4x16xf32>
    %32 = vector.extract_strided_slice %21 {offsets = [0, 64], sizes = [4, 16], strides = [1, 1]} : vector<8x96xf32> to vector<4x16xf32>
    %33 = tpu.transpose %31, [1, 0] : vector<4x16xf32> -> vector<16x4xf32>
    %cst_26 = arith.constant dense<0.000000e+00> : vector<8x4xf32>
    %34 = tpu.matmul %28, %33, %cst_26 {dimension_numbers = #tpu.dot_dimension_numbers<[1], [0], [0], [1], [0, 0, 1, 1], [], []>} : vector<8x16xf32>, vector<16x4xf32>, vector<8x4xf32> -> vector<8x4xf32>
    %35 = tpu.transpose %29, [1, 0] : vector<8x16xf32> -> vector<16x8xf32>
    %cst_27 = arith.constant dense<0.000000e+00> : vector<8x8xf32>
    %36 = tpu.matmul %28, %35, %cst_27 {dimension_numbers = #tpu.dot_dimension_numbers<[1], [0], [0], [1], [0, 0, 1, 1], [], []>} : vector<8x16xf32>, vector<16x8xf32>, vector<8x8xf32> -> vector<8x8xf32>
    %cst_28 = arith.constant -1.000000e+30 : f32
    %37 = vector.broadcast %cst_28 : f32 to vector<8x8xf32>
    %38 = arith.select %24, %37, %36 : vector<8x8xi1>, vector<8x8xf32>
    %cst_29 = arith.constant dense<0xFF800000> : vector<8xf32>
    %39 = vector.multi_reduction <maximumf>, %34, %cst_29 [1] : vector<8x4xf32> to vector<8xf32>
    %40 = vector.shape_cast %39 : vector<8xf32> to vector<8x1xf32>
    %cst_30 = arith.constant dense<0xFF800000> : vector<8xf32>
    %41 = vector.multi_reduction <maximumf>, %38, %cst_30 [1] : vector<8x8xf32> to vector<8xf32>
    %42 = vector.shape_cast %41 : vector<8xf32> to vector<8x1xf32>
    %43 = arith.maximumf %40, %42 : vector<8x1xf32>
    %44 = vector.broadcast %43 : vector<8x1xf32> to vector<8x4xf32>
    %45 = arith.subf %34, %44 : vector<8x4xf32>
    %46 = math.exp %45 : vector<8x4xf32>
    %47 = vector.broadcast %43 : vector<8x1xf32> to vector<8x8xf32>
    %48 = arith.subf %38, %47 : vector<8x8xf32>
    %49 = math.exp %48 : vector<8x8xf32>
    %cst_31 = arith.constant dense<0.000000e+00> : vector<8xf32>
    %50 = vector.multi_reduction <add>, %46, %cst_31 [1] : vector<8x4xf32> to vector<8xf32>
    %51 = vector.shape_cast %50 : vector<8xf32> to vector<8x1xf32>
    %cst_32 = arith.constant dense<0.000000e+00> : vector<8xf32>
    %52 = vector.multi_reduction <add>, %49, %cst_32 [1] : vector<8x8xf32> to vector<8xf32>
    %53 = vector.shape_cast %52 : vector<8xf32> to vector<8x1xf32>
    %54 = arith.addf %51, %53 : vector<8x1xf32>
    %55 = tpu.reciprocal %54 {approx = true} : vector<8x1xf32> -> vector<8x1xf32>
    %cst_33 = arith.constant dense<0.000000e+00> : vector<8x16xf32>
    %56 = tpu.matmul %46, %32, %cst_33 {dimension_numbers = #tpu.dot_dimension_numbers<[1], [0], [0], [1], [0, 0, 1, 1], [], []>} : vector<8x4xf32>, vector<4x16xf32>, vector<8x16xf32> -> vector<8x16xf32>
    %cst_34 = arith.constant dense<0.000000e+00> : vector<8x16xf32>
    %57 = tpu.matmul %49, %30, %cst_34 {dimension_numbers = #tpu.dot_dimension_numbers<[1], [0], [0], [1], [0, 0, 1, 1], [], []>} : vector<8x8xf32>, vector<8x16xf32>, vector<8x16xf32> -> vector<8x16xf32>
    %58 = arith.addf %56, %57 : vector<8x16xf32>
    %59 = vector.broadcast %55 : vector<8x1xf32> to vector<8x16xf32>
    %60 = arith.mulf %58, %59 : vector<8x16xf32>
    %61 = arith.truncf %60 : vector<8x16xf32> to vector<8x16xbf16>
    %62 = vector.extract_strided_slice %1 {offsets = [0, 0], sizes = [16, 32], strides = [1, 1]} : vector<32x32xbf16> to vector<16x32xbf16>
    %cst_35 = arith.constant dense<0.000000e+00> : vector<8x32xf32>
    %63 = tpu.matmul %61, %62, %cst_35 {dimension_numbers = #tpu.dot_dimension_numbers<[1], [0], [0], [1], [0, 0, 1, 1], [], []>} : vector<8x16xbf16>, vector<16x32xbf16>, vector<8x32xf32> -> vector<8x32xf32>
    %64 = arith.addf %25, %63 : vector<8x32xf32>
    %65 = vector.extract_strided_slice %19 {offsets = [0, 16], sizes = [8, 16], strides = [1, 1]} : vector<16x96xf32> to vector<8x16xf32>
    %cst_36 = arith.constant 2.500000e-01 : f32
    %66 = vector.broadcast %cst_36 : f32 to vector<8x16xf32>
    %67 = arith.mulf %65, %66 : vector<8x16xf32>
    %68 = vector.extract_strided_slice %19 {offsets = [0, 48], sizes = [8, 16], strides = [1, 1]} : vector<16x96xf32> to vector<8x16xf32>
    %69 = vector.extract_strided_slice %19 {offsets = [0, 80], sizes = [8, 16], strides = [1, 1]} : vector<16x96xf32> to vector<8x16xf32>
    %70 = vector.extract_strided_slice %21 {offsets = [0, 48], sizes = [4, 16], strides = [1, 1]} : vector<8x96xf32> to vector<4x16xf32>
    %71 = vector.extract_strided_slice %21 {offsets = [0, 80], sizes = [4, 16], strides = [1, 1]} : vector<8x96xf32> to vector<4x16xf32>
    %72 = tpu.transpose %70, [1, 0] : vector<4x16xf32> -> vector<16x4xf32>
    %cst_37 = arith.constant dense<0.000000e+00> : vector<8x4xf32>
    %73 = tpu.matmul %67, %72, %cst_37 {dimension_numbers = #tpu.dot_dimension_numbers<[1], [0], [0], [1], [0, 0, 1, 1], [], []>} : vector<8x16xf32>, vector<16x4xf32>, vector<8x4xf32> -> vector<8x4xf32>
    %74 = tpu.transpose %68, [1, 0] : vector<8x16xf32> -> vector<16x8xf32>
    %cst_38 = arith.constant dense<0.000000e+00> : vector<8x8xf32>
    %75 = tpu.matmul %67, %74, %cst_38 {dimension_numbers = #tpu.dot_dimension_numbers<[1], [0], [0], [1], [0, 0, 1, 1], [], []>} : vector<8x16xf32>, vector<16x8xf32>, vector<8x8xf32> -> vector<8x8xf32>
    %cst_39 = arith.constant -1.000000e+30 : f32
    %76 = vector.broadcast %cst_39 : f32 to vector<8x8xf32>
    %77 = arith.select %24, %76, %75 : vector<8x8xi1>, vector<8x8xf32>
    %cst_40 = arith.constant dense<0xFF800000> : vector<8xf32>
    %78 = vector.multi_reduction <maximumf>, %73, %cst_40 [1] : vector<8x4xf32> to vector<8xf32>
    %79 = vector.shape_cast %78 : vector<8xf32> to vector<8x1xf32>
    %cst_41 = arith.constant dense<0xFF800000> : vector<8xf32>
    %80 = vector.multi_reduction <maximumf>, %77, %cst_41 [1] : vector<8x8xf32> to vector<8xf32>
    %81 = vector.shape_cast %80 : vector<8xf32> to vector<8x1xf32>
    %82 = arith.maximumf %79, %81 : vector<8x1xf32>
    %83 = vector.broadcast %82 : vector<8x1xf32> to vector<8x4xf32>
    %84 = arith.subf %73, %83 : vector<8x4xf32>
    %85 = math.exp %84 : vector<8x4xf32>
    %86 = vector.broadcast %82 : vector<8x1xf32> to vector<8x8xf32>
    %87 = arith.subf %77, %86 : vector<8x8xf32>
    %88 = math.exp %87 : vector<8x8xf32>
    %cst_42 = arith.constant dense<0.000000e+00> : vector<8xf32>
    %89 = vector.multi_reduction <add>, %85, %cst_42 [1] : vector<8x4xf32> to vector<8xf32>
    %90 = vector.shape_cast %89 : vector<8xf32> to vector<8x1xf32>
    %cst_43 = arith.constant dense<0.000000e+00> : vector<8xf32>
    %91 = vector.multi_reduction <add>, %88, %cst_43 [1] : vector<8x8xf32> to vector<8xf32>
    %92 = vector.shape_cast %91 : vector<8xf32> to vector<8x1xf32>
    %93 = arith.addf %90, %92 : vector<8x1xf32>
    %94 = tpu.reciprocal %93 {approx = true} : vector<8x1xf32> -> vector<8x1xf32>
    %cst_44 = arith.constant dense<0.000000e+00> : vector<8x16xf32>
    %95 = tpu.matmul %85, %71, %cst_44 {dimension_numbers = #tpu.dot_dimension_numbers<[1], [0], [0], [1], [0, 0, 1, 1], [], []>} : vector<8x4xf32>, vector<4x16xf32>, vector<8x16xf32> -> vector<8x16xf32>
    %cst_45 = arith.constant dense<0.000000e+00> : vector<8x16xf32>
    %96 = tpu.matmul %88, %69, %cst_45 {dimension_numbers = #tpu.dot_dimension_numbers<[1], [0], [0], [1], [0, 0, 1, 1], [], []>} : vector<8x8xf32>, vector<8x16xf32>, vector<8x16xf32> -> vector<8x16xf32>
    %97 = arith.addf %95, %96 : vector<8x16xf32>
    %98 = vector.broadcast %94 : vector<8x1xf32> to vector<8x16xf32>
    %99 = arith.mulf %97, %98 : vector<8x16xf32>
    %100 = arith.truncf %99 : vector<8x16xf32> to vector<8x16xbf16>
    %101 = vector.extract_strided_slice %1 {offsets = [16, 0], sizes = [16, 32], strides = [1, 1]} : vector<32x32xbf16> to vector<16x32xbf16>
    %cst_46 = arith.constant dense<0.000000e+00> : vector<8x32xf32>
    %102 = tpu.matmul %100, %101, %cst_46 {dimension_numbers = #tpu.dot_dimension_numbers<[1], [0], [0], [1], [0, 0, 1, 1], [], []>} : vector<8x16xbf16>, vector<16x32xbf16>, vector<8x32xf32> -> vector<8x32xf32>
    %103 = arith.addf %64, %102 : vector<8x32xf32>
    %cst_47 = arith.constant 0.000000e+00 : f32
    %104 = vector.broadcast %cst_47 : f32 to vector<8x32xf32>
    %105 = vector.extract_strided_slice %19 {offsets = [8, 0], sizes = [8, 16], strides = [1, 1]} : vector<16x96xf32> to vector<8x16xf32>
    %cst_48 = arith.constant 2.500000e-01 : f32
    %106 = vector.broadcast %cst_48 : f32 to vector<8x16xf32>
    %107 = arith.mulf %105, %106 : vector<8x16xf32>
    %108 = vector.extract_strided_slice %19 {offsets = [8, 32], sizes = [8, 16], strides = [1, 1]} : vector<16x96xf32> to vector<8x16xf32>
    %109 = vector.extract_strided_slice %19 {offsets = [8, 64], sizes = [8, 16], strides = [1, 1]} : vector<16x96xf32> to vector<8x16xf32>
    %110 = vector.extract_strided_slice %21 {offsets = [4, 32], sizes = [4, 16], strides = [1, 1]} : vector<8x96xf32> to vector<4x16xf32>
    %111 = vector.extract_strided_slice %21 {offsets = [4, 64], sizes = [4, 16], strides = [1, 1]} : vector<8x96xf32> to vector<4x16xf32>
    %112 = tpu.transpose %110, [1, 0] : vector<4x16xf32> -> vector<16x4xf32>
    %cst_49 = arith.constant dense<0.000000e+00> : vector<8x4xf32>
    %113 = tpu.matmul %107, %112, %cst_49 {dimension_numbers = #tpu.dot_dimension_numbers<[1], [0], [0], [1], [0, 0, 1, 1], [], []>} : vector<8x16xf32>, vector<16x4xf32>, vector<8x4xf32> -> vector<8x4xf32>
    %114 = tpu.transpose %108, [1, 0] : vector<8x16xf32> -> vector<16x8xf32>
    %cst_50 = arith.constant dense<0.000000e+00> : vector<8x8xf32>
    %115 = tpu.matmul %107, %114, %cst_50 {dimension_numbers = #tpu.dot_dimension_numbers<[1], [0], [0], [1], [0, 0, 1, 1], [], []>} : vector<8x16xf32>, vector<16x8xf32>, vector<8x8xf32> -> vector<8x8xf32>
    %cst_51 = arith.constant -1.000000e+30 : f32
    %116 = vector.broadcast %cst_51 : f32 to vector<8x8xf32>
    %117 = arith.select %24, %116, %115 : vector<8x8xi1>, vector<8x8xf32>
    %cst_52 = arith.constant dense<0xFF800000> : vector<8xf32>
    %118 = vector.multi_reduction <maximumf>, %113, %cst_52 [1] : vector<8x4xf32> to vector<8xf32>
    %119 = vector.shape_cast %118 : vector<8xf32> to vector<8x1xf32>
    %cst_53 = arith.constant dense<0xFF800000> : vector<8xf32>
    %120 = vector.multi_reduction <maximumf>, %117, %cst_53 [1] : vector<8x8xf32> to vector<8xf32>
    %121 = vector.shape_cast %120 : vector<8xf32> to vector<8x1xf32>
    %122 = arith.maximumf %119, %121 : vector<8x1xf32>
    %123 = vector.broadcast %122 : vector<8x1xf32> to vector<8x4xf32>
    %124 = arith.subf %113, %123 : vector<8x4xf32>
    %125 = math.exp %124 : vector<8x4xf32>
    %126 = vector.broadcast %122 : vector<8x1xf32> to vector<8x8xf32>
    %127 = arith.subf %117, %126 : vector<8x8xf32>
    %128 = math.exp %127 : vector<8x8xf32>
    %cst_54 = arith.constant dense<0.000000e+00> : vector<8xf32>
    %129 = vector.multi_reduction <add>, %125, %cst_54 [1] : vector<8x4xf32> to vector<8xf32>
    %130 = vector.shape_cast %129 : vector<8xf32> to vector<8x1xf32>
    %cst_55 = arith.constant dense<0.000000e+00> : vector<8xf32>
    %131 = vector.multi_reduction <add>, %128, %cst_55 [1] : vector<8x8xf32> to vector<8xf32>
    %132 = vector.shape_cast %131 : vector<8xf32> to vector<8x1xf32>
    %133 = arith.addf %130, %132 : vector<8x1xf32>
    %134 = tpu.reciprocal %133 {approx = true} : vector<8x1xf32> -> vector<8x1xf32>
    %cst_56 = arith.constant dense<0.000000e+00> : vector<8x16xf32>
    %135 = tpu.matmul %125, %111, %cst_56 {dimension_numbers = #tpu.dot_dimension_numbers<[1], [0], [0], [1], [0, 0, 1, 1], [], []>} : vector<8x4xf32>, vector<4x16xf32>, vector<8x16xf32> -> vector<8x16xf32>
    %cst_57 = arith.constant dense<0.000000e+00> : vector<8x16xf32>
    %136 = tpu.matmul %128, %109, %cst_57 {dimension_numbers = #tpu.dot_dimension_numbers<[1], [0], [0], [1], [0, 0, 1, 1], [], []>} : vector<8x8xf32>, vector<8x16xf32>, vector<8x16xf32> -> vector<8x16xf32>
    %137 = arith.addf %135, %136 : vector<8x16xf32>
    %138 = vector.broadcast %134 : vector<8x1xf32> to vector<8x16xf32>
    %139 = arith.mulf %137, %138 : vector<8x16xf32>
    %140 = arith.truncf %139 : vector<8x16xf32> to vector<8x16xbf16>
    %141 = vector.extract_strided_slice %1 {offsets = [0, 0], sizes = [16, 32], strides = [1, 1]} : vector<32x32xbf16> to vector<16x32xbf16>
    %cst_58 = arith.constant dense<0.000000e+00> : vector<8x32xf32>
    %142 = tpu.matmul %140, %141, %cst_58 {dimension_numbers = #tpu.dot_dimension_numbers<[1], [0], [0], [1], [0, 0, 1, 1], [], []>} : vector<8x16xbf16>, vector<16x32xbf16>, vector<8x32xf32> -> vector<8x32xf32>
    %143 = arith.addf %104, %142 : vector<8x32xf32>
    %144 = vector.extract_strided_slice %19 {offsets = [8, 16], sizes = [8, 16], strides = [1, 1]} : vector<16x96xf32> to vector<8x16xf32>
    %cst_59 = arith.constant 2.500000e-01 : f32
    %145 = vector.broadcast %cst_59 : f32 to vector<8x16xf32>
    %146 = arith.mulf %144, %145 : vector<8x16xf32>
    %147 = vector.extract_strided_slice %19 {offsets = [8, 48], sizes = [8, 16], strides = [1, 1]} : vector<16x96xf32> to vector<8x16xf32>
    %148 = vector.extract_strided_slice %19 {offsets = [8, 80], sizes = [8, 16], strides = [1, 1]} : vector<16x96xf32> to vector<8x16xf32>
    %149 = vector.extract_strided_slice %21 {offsets = [4, 48], sizes = [4, 16], strides = [1, 1]} : vector<8x96xf32> to vector<4x16xf32>
    %150 = vector.extract_strided_slice %21 {offsets = [4, 80], sizes = [4, 16], strides = [1, 1]} : vector<8x96xf32> to vector<4x16xf32>
    %151 = tpu.transpose %149, [1, 0] : vector<4x16xf32> -> vector<16x4xf32>
    %cst_60 = arith.constant dense<0.000000e+00> : vector<8x4xf32>
    %152 = tpu.matmul %146, %151, %cst_60 {dimension_numbers = #tpu.dot_dimension_numbers<[1], [0], [0], [1], [0, 0, 1, 1], [], []>} : vector<8x16xf32>, vector<16x4xf32>, vector<8x4xf32> -> vector<8x4xf32>
    %153 = tpu.transpose %147, [1, 0] : vector<8x16xf32> -> vector<16x8xf32>
    %cst_61 = arith.constant dense<0.000000e+00> : vector<8x8xf32>
    %154 = tpu.matmul %146, %153, %cst_61 {dimension_numbers = #tpu.dot_dimension_numbers<[1], [0], [0], [1], [0, 0, 1, 1], [], []>} : vector<8x16xf32>, vector<16x8xf32>, vector<8x8xf32> -> vector<8x8xf32>
    %cst_62 = arith.constant -1.000000e+30 : f32
    %155 = vector.broadcast %cst_62 : f32 to vector<8x8xf32>
    %156 = arith.select %24, %155, %154 : vector<8x8xi1>, vector<8x8xf32>
    %cst_63 = arith.constant dense<0xFF800000> : vector<8xf32>
    %157 = vector.multi_reduction <maximumf>, %152, %cst_63 [1] : vector<8x4xf32> to vector<8xf32>
    %158 = vector.shape_cast %157 : vector<8xf32> to vector<8x1xf32>
    %cst_64 = arith.constant dense<0xFF800000> : vector<8xf32>
    %159 = vector.multi_reduction <maximumf>, %156, %cst_64 [1] : vector<8x8xf32> to vector<8xf32>
    %160 = vector.shape_cast %159 : vector<8xf32> to vector<8x1xf32>
    %161 = arith.maximumf %158, %160 : vector<8x1xf32>
    %162 = vector.broadcast %161 : vector<8x1xf32> to vector<8x4xf32>
    %163 = arith.subf %152, %162 : vector<8x4xf32>
    %164 = math.exp %163 : vector<8x4xf32>
    %165 = vector.broadcast %161 : vector<8x1xf32> to vector<8x8xf32>
    %166 = arith.subf %156, %165 : vector<8x8xf32>
    %167 = math.exp %166 : vector<8x8xf32>
    %cst_65 = arith.constant dense<0.000000e+00> : vector<8xf32>
    %168 = vector.multi_reduction <add>, %164, %cst_65 [1] : vector<8x4xf32> to vector<8xf32>
    %169 = vector.shape_cast %168 : vector<8xf32> to vector<8x1xf32>
    %cst_66 = arith.constant dense<0.000000e+00> : vector<8xf32>
    %170 = vector.multi_reduction <add>, %167, %cst_66 [1] : vector<8x8xf32> to vector<8xf32>
    %171 = vector.shape_cast %170 : vector<8xf32> to vector<8x1xf32>
    %172 = arith.addf %169, %171 : vector<8x1xf32>
    %173 = tpu.reciprocal %172 {approx = true} : vector<8x1xf32> -> vector<8x1xf32>
    %cst_67 = arith.constant dense<0.000000e+00> : vector<8x16xf32>
    %174 = tpu.matmul %164, %150, %cst_67 {dimension_numbers = #tpu.dot_dimension_numbers<[1], [0], [0], [1], [0, 0, 1, 1], [], []>} : vector<8x4xf32>, vector<4x16xf32>, vector<8x16xf32> -> vector<8x16xf32>
    %cst_68 = arith.constant dense<0.000000e+00> : vector<8x16xf32>
    %175 = tpu.matmul %167, %148, %cst_68 {dimension_numbers = #tpu.dot_dimension_numbers<[1], [0], [0], [1], [0, 0, 1, 1], [], []>} : vector<8x8xf32>, vector<8x16xf32>, vector<8x16xf32> -> vector<8x16xf32>
    %176 = arith.addf %174, %175 : vector<8x16xf32>
    %177 = vector.broadcast %173 : vector<8x1xf32> to vector<8x16xf32>
    %178 = arith.mulf %176, %177 : vector<8x16xf32>
    %179 = arith.truncf %178 : vector<8x16xf32> to vector<8x16xbf16>
    %180 = vector.extract_strided_slice %1 {offsets = [16, 0], sizes = [16, 32], strides = [1, 1]} : vector<32x32xbf16> to vector<16x32xbf16>
    %cst_69 = arith.constant dense<0.000000e+00> : vector<8x32xf32>
    %181 = tpu.matmul %179, %180, %cst_69 {dimension_numbers = #tpu.dot_dimension_numbers<[1], [0], [0], [1], [0, 0, 1, 1], [], []>} : vector<8x16xbf16>, vector<16x32xbf16>, vector<8x32xf32> -> vector<8x32xf32>
    %182 = arith.addf %143, %181 : vector<8x32xf32>
    %183 = tpu.concatenate %103, %182 in 0 : vector<8x32xf32>, vector<8x32xf32> -> vector<16x32xf32>
    %184 = arith.addf %16, %183 : vector<16x32xf32>
    %cst_70 = arith.constant dense<0.000000e+00> : vector<16xf32>
    %185 = vector.multi_reduction <add>, %184, %cst_70 [1] : vector<16x32xf32> to vector<16xf32>
    %186 = vector.shape_cast %185 : vector<16xf32> to vector<16x1xf32>
    %cst_71 = arith.constant 3.200000e+01 : f32
    %187 = vector.broadcast %cst_71 : f32 to vector<16x1xf32>
    %188 = arith.divf %186, %187 : vector<16x1xf32>
    %189 = vector.broadcast %188 : vector<16x1xf32> to vector<16x32xf32>
    %190 = arith.subf %184, %189 : vector<16x32xf32>
    %191 = arith.mulf %190, %190 : vector<16x32xf32>
    %cst_72 = arith.constant dense<0.000000e+00> : vector<16xf32>
    %192 = vector.multi_reduction <add>, %191, %cst_72 [1] : vector<16x32xf32> to vector<16xf32>
    %193 = vector.shape_cast %192 : vector<16xf32> to vector<16x1xf32>
    %cst_73 = arith.constant 3.200000e+01 : f32
    %194 = vector.broadcast %cst_73 : f32 to vector<16x1xf32>
    %195 = arith.divf %193, %194 : vector<16x1xf32>
    %196 = vector.broadcast %188 : vector<16x1xf32> to vector<16x32xf32>
    %197 = arith.subf %184, %196 : vector<16x32xf32>
    %cst_74 = arith.constant 9.99999974E-6 : f32
    %198 = vector.broadcast %cst_74 : f32 to vector<16x1xf32>
    %199 = arith.addf %195, %198 : vector<16x1xf32>
    %200 = math.rsqrt %199 : vector<16x1xf32>
    %201 = vector.broadcast %200 : vector<16x1xf32> to vector<16x32xf32>
    %202 = arith.mulf %197, %201 : vector<16x32xf32>
    %203 = vector.shape_cast %9 : vector<32xf32> to vector<1x32xf32>
    %204 = vector.broadcast %203 : vector<1x32xf32> to vector<16x32xf32>
    %205 = arith.mulf %202, %204 : vector<16x32xf32>
    %206 = vector.shape_cast %11 : vector<32xf32> to vector<1x32xf32>
    %207 = vector.broadcast %206 : vector<1x32xf32> to vector<16x32xf32>
    %208 = arith.addf %205, %207 : vector<16x32xf32>
    %209 = arith.truncf %208 : vector<16x32xf32> to vector<16x32xbf16>
    %cst_75 = arith.constant dense<0.000000e+00> : vector<16x64xf32>
    %210 = tpu.matmul %209, %2, %cst_75 {dimension_numbers = #tpu.dot_dimension_numbers<[1], [0], [0], [1], [0, 0, 1, 1], [], []>} : vector<16x32xbf16>, vector<32x64xbf16>, vector<16x64xf32> -> vector<16x64xf32>
    %211 = vector.shape_cast %5 : vector<64xf32> to vector<1x64xf32>
    %212 = vector.broadcast %211 : vector<1x64xf32> to vector<16x64xf32>
    %213 = arith.addf %210, %212 : vector<16x64xf32>
    %cst_76 = arith.constant 0.000000e+00 : f32
    %214 = vector.broadcast %cst_76 : f32 to vector<16x64xf32>
    %215 = arith.maximumf %213, %214 : vector<16x64xf32>
    %216 = arith.truncf %215 : vector<16x64xf32> to vector<16x64xbf16>
    %cst_77 = arith.constant dense<0.000000e+00> : vector<16x32xf32>
    %217 = tpu.matmul %216, %3, %cst_77 {dimension_numbers = #tpu.dot_dimension_numbers<[1], [0], [0], [1], [0, 0, 1, 1], [], []>} : vector<16x64xbf16>, vector<64x32xbf16>, vector<16x32xf32> -> vector<16x32xf32>
    %218 = vector.shape_cast %7 : vector<32xf32> to vector<1x32xf32>
    %219 = vector.broadcast %218 : vector<1x32xf32> to vector<16x32xf32>
    %220 = arith.addf %217, %219 : vector<16x32xf32>
    %221 = arith.addf %208, %220 : vector<16x32xf32>
    %cst_78 = arith.constant dense<0.000000e+00> : vector<16xf32>
    %222 = vector.multi_reduction <add>, %221, %cst_78 [1] : vector<16x32xf32> to vector<16xf32>
    %223 = vector.shape_cast %222 : vector<16xf32> to vector<16x1xf32>
    %cst_79 = arith.constant 3.200000e+01 : f32
    %224 = vector.broadcast %cst_79 : f32 to vector<16x1xf32>
    %225 = arith.divf %223, %224 : vector<16x1xf32>
    %226 = vector.broadcast %225 : vector<16x1xf32> to vector<16x32xf32>
    %227 = arith.subf %221, %226 : vector<16x32xf32>
    %228 = arith.mulf %227, %227 : vector<16x32xf32>
    %cst_80 = arith.constant dense<0.000000e+00> : vector<16xf32>
    %229 = vector.multi_reduction <add>, %228, %cst_80 [1] : vector<16x32xf32> to vector<16xf32>
    %230 = vector.shape_cast %229 : vector<16xf32> to vector<16x1xf32>
    %cst_81 = arith.constant 3.200000e+01 : f32
    %231 = vector.broadcast %cst_81 : f32 to vector<16x1xf32>
    %232 = arith.divf %230, %231 : vector<16x1xf32>
    %233 = vector.broadcast %225 : vector<16x1xf32> to vector<16x32xf32>
    %234 = arith.subf %221, %233 : vector<16x32xf32>
    %cst_82 = arith.constant 9.99999974E-6 : f32
    %235 = vector.broadcast %cst_82 : f32 to vector<16x1xf32>
    %236 = arith.addf %232, %235 : vector<16x1xf32>
    %237 = math.rsqrt %236 : vector<16x1xf32>
    %238 = vector.broadcast %237 : vector<16x1xf32> to vector<16x32xf32>
    %239 = arith.mulf %234, %238 : vector<16x32xf32>
    %240 = vector.shape_cast %13 : vector<32xf32> to vector<1x32xf32>
    %241 = vector.broadcast %240 : vector<1x32xf32> to vector<16x32xf32>
    %242 = arith.mulf %239, %241 : vector<16x32xf32>
    %243 = vector.shape_cast %15 : vector<32xf32> to vector<1x32xf32>
    %244 = vector.broadcast %243 : vector<1x32xf32> to vector<16x32xf32>
    %245 = arith.addf %242, %244 : vector<16x32xf32>
    %c0_83 = arith.constant 0 : index
    %c0_84 = arith.constant 0 : index
    %246 = vector.load %arg12[%c0_83, %c0_84] : memref<16x32xf32, #tpu.memory_space<vmem>>, vector<16x32xf32>
    tpu.vector_store %arg12[%c0_83, %c0_84], %245 {strides = array<i32>} : memref<16x32xf32, #tpu.memory_space<vmem>>, vector<16x32xf32>,
    return
  }
}

</mosaic_0001>

<llo_original>
// kernel: tpu_custom_call.1
$region0: #{tpu_custom_call.1}
  #allocation0 [shape = 'u32[]', space=smem, size = 0x4, offset = 0x4, fixed_abs, tag = 'smem constant byte address 0x4 - core index']
  #allocation1 [shape = 'u32[72,128]{1,0:T(1,128)}', space=vmem, size = 0x9000, scoped, tag = 'internal scratch']
  %s0 = inlined_call_operand.vmem [shape: f32[16,32], index: 0, kind: input, shape index: {}]
  %s1 = inlined_call_operand.hbm [shape: f32[8,32], index: 1, kind: input, shape index: {}]
  %s2 = inlined_call_operand.vmem [shape: bf16[32,96], index: 2, kind: input, shape index: {}]
  %s3 = inlined_call_operand.vmem [shape: bf16[32,32], index: 3, kind: input, shape index: {}]
  %s4 = inlined_call_operand.vmem [shape: f32[1,32], index: 4, kind: input, shape index: {}]
  %s5 = inlined_call_operand.vmem [shape: f32[1,32], index: 5, kind: input, shape index: {}]
  %s6 = inlined_call_operand.hbm [shape: bf16[32,64], index: 6, kind: input, shape index: {}]
  %s7 = inlined_call_operand.vmem [shape: f32[1,64], index: 7, kind: input, shape index: {}]
  %s8 = inlined_call_operand.vmem [shape: bf16[64,32], index: 8, kind: input, shape index: {}]
  %s9 = inlined_call_operand.vmem [shape: f32[1,32], index: 9, kind: input, shape index: {}]
  %s10 = inlined_call_operand.vmem [shape: f32[1,32], index: 10, kind: input, shape index: {}]
  %s11 = inlined_call_operand.vmem [shape: f32[1,32], index: 11, kind: input, shape index: {}]
  %s12 = inlined_call_operand.hbm [shape: f32[16,32], index: 12, kind: output, shape index: {}]
  %s13 = sld [smem:[#allocation0]]
  $region66: #{tpu_custom_call.1} parent=0
    _
  %s15 = ssub.s32 1, %s13
  %s16 = scalar_select 0, %s15, %s13
  $region1: #{tpu_custom_call.1} parent=0
    #allocation2 [shape = 'u8[4096]{0}', space=vmem, size = 0x1000, scoped, tag = 'input window, operand 1, single buffered']
    #allocation3 [shape = 's32[1]{0}', space=sflag, size = 0x4, scoped, tag = 'scoped memory for tpu_custom_call.1']
    #allocation4 [shape = 's32[1]{0}', space=sflag, size = 0x4, scoped, tag = 'scoped memory for tpu_custom_call.1']
    #allocation5 [shape = 'u8[8192]{0}', space=vmem, size = 0x2000, scoped, tag = 'input window, operand 6, single buffered']
    #allocation6 [shape = 's32[1]{0}', space=sflag, size = 0x4, scoped, tag = 'scoped memory for tpu_custom_call.1']
    #allocation7 [shape = 'u8[8192]{0}', space=vmem, size = 0x2000, scoped, tag = 'output window, operand 0, single buffered']
    %17 = vsyncpa [#allocation3], 0
    %18 = vsyncpa [#allocation6], 0
    %19 = vsyncpa [#allocation4], 0
    // Predicated region
    $region2: #{tpu_custom_call.1} parent=1 // pred_check
      _
    $region3: #{tpu_custom_call.1} parent=1 // pred_check_branch
      %21 = sbr.rel (0) target = $region5
    $region4: #{tpu_custom_call.1} parent=1 // pred_region
      _
    $region5: #{tpu_custom_call.1} parent=1 // pred_fallthru
      _
    // Predicated region
    $region6: #{tpu_custom_call.1} parent=1 // pred_check
      _
    $region7: #{tpu_custom_call.1} parent=1 // pred_check_branch
      %23 = sbr.rel (0) target = $region9
    $region8: #{tpu_custom_call.1} parent=1 // pred_region
      %25 = vsyncadd [#allocation3], 0
      %s27 = sshll.u32 %s1, 4
      %s28 = int_to_ptr.hbm [resolvable:$true] %s27
      %s29 = sshll.u32 [#allocation2], 4
      %s30 = int_to_ptr.vmem [resolvable:$true] %s29
      %32 = dma.hbm_to_vmem [thread:$0]  %s28, 128, %s30, [#allocation3]
    $region9: #{tpu_custom_call.1} parent=1 // pred_fallthru
      _
    // Predicated region
    $region10: #{tpu_custom_call.1} parent=1 // pred_check
      _
    $region11: #{tpu_custom_call.1} parent=1 // pred_check_branch
      %34 = sbr.rel (0) target = $region13
    $region12: #{tpu_custom_call.1} parent=1 // pred_region
      _
    $region13: #{tpu_custom_call.1} parent=1 // pred_fallthru
      _
    // Predicated region
    $region14: #{tpu_custom_call.1} parent=1 // pred_check
      _
    $region15: #{tpu_custom_call.1} parent=1 // pred_check_branch
      %36 = sbr.rel (0) target = $region17
    $region16: #{tpu_custom_call.1} parent=1 // pred_region
      _
    $region17: #{tpu_custom_call.1} parent=1 // pred_fallthru
      _
    // Predicated region
    $region18: #{tpu_custom_call.1} parent=1 // pred_check
      _
    $region19: #{tpu_custom_call.1} parent=1 // pred_check_branch
      %38 = sbr.rel (0) target = $region21
    $region20: #{tpu_custom_call.1} parent=1 // pred_region
      _
    $region21: #{tpu_custom_call.1} parent=1 // pred_fallthru
      _
    // Predicated region
    $region22: #{tpu_custom_call.1} parent=1 // pred_check
      _
    $region23: #{tpu_custom_call.1} parent=1 // pred_check_branch
      %40 = sbr.rel (0) target = $region25
    $region24: #{tpu_custom_call.1} parent=1 // pred_region
      _
    $region25: #{tpu_custom_call.1} parent=1 // pred_fallthru
      _
    // Predicated region
    $region26: #{tpu_custom_call.1} parent=1 // pred_check
      _
    $region27: #{tpu_custom_call.1} parent=1 // pred_check_branch
      %42 = sbr.rel (0) target = $region29
    $region28: #{tpu_custom_call.1} parent=1 // pred_region
      %44 = vsyncadd [#allocation6], 0
      %s45 = sshll.u32 %s6, 4
      %s46 = int_to_ptr.hbm [resolvable:$true] %s45
      %s47 = sshll.u32 [#allocation5], 4
      %s48 = int_to_ptr.vmem [resolvable:$true] %s47
      %53 = dma.hbm_to_vmem [thread:$0]  %s46, 256, %s48, [#allocation6], 64, 64, 4
    $region29: #{tpu_custom_call.1} parent=1 // pred_fallthru
      _
    // Predicated region
    $region30: #{tpu_custom_call.1} parent=1 // pred_check
      _
    $region31: #{tpu_custom_call.1} parent=1 // pred_check_branch
      %55 = sbr.rel (0) target = $region33
    $region32: #{tpu_custom_call.1} parent=1 // pred_region
      _
    $region33: #{tpu_custom_call.1} parent=1 // pred_fallthru
      _
    // Predicated region
    $region34: #{tpu_custom_call.1} parent=1 // pred_check
      _
    $region35: #{tpu_custom_call.1} parent=1 // pred_check_branch
      %57 = sbr.rel (0) target = $region37
    $region36: #{tpu_custom_call.1} parent=1 // pred_region
      _
    $region37: #{tpu_custom_call.1} parent=1 // pred_fallthru
      _
    // Predicated region
    $region38: #{tpu_custom_call.1} parent=1 // pred_check
      _
    $region39: #{tpu_custom_call.1} parent=1 // pred_check_branch
      %59 = sbr.rel (0) target = $region41
    $region40: #{tpu_custom_call.1} parent=1 // pred_region
      _
    $region41: #{tpu_custom_call.1} parent=1 // pred_fallthru
      _
    // Predicated region
    $region42: #{tpu_custom_call.1} parent=1 // pred_check
      _
    $region43: #{tpu_custom_call.1} parent=1 // pred_check_branch
      %61 = sbr.rel (0) target = $region45
    $region44: #{tpu_custom_call.1} parent=1 // pred_region
      _
    $region45: #{tpu_custom_call.1} parent=1 // pred_fallthru
      _
    // Predicated region
    $region46: #{tpu_custom_call.1} parent=1 // pred_check
      _
    $region47: #{tpu_custom_call.1} parent=1 // pred_check_branch
      %63 = sbr.rel (0) target = $region49
    $region48: #{tpu_custom_call.1} parent=1 // pred_region
      _
    $region49: #{tpu_custom_call.1} parent=1 // pred_fallthru
      _
    // Predicated region
    $region50: #{tpu_custom_call.1} parent=1 // pred_check
      _
    $region51: #{tpu_custom_call.1} parent=1 // pred_check_branch
      %65 = sbr.rel (0) target = $region53
    $region52: #{tpu_custom_call.1} parent=1 // pred_region
      %67 = dma.done [#allocation3], 128
    $region53: #{tpu_custom_call.1} parent=1 // pred_fallthru
      _
    // Predicated region
    $region54: #{tpu_custom_call.1} parent=1 // pred_check
      _
    $region55: #{tpu_custom_call.1} parent=1 // pred_check_branch
      %69 = sbr.rel (0) target = $region57
    $region56: #{tpu_custom_call.1} parent=1 // pred_region
      %71 = dma.done [#allocation6], 256
    $region57: #{tpu_custom_call.1} parent=1 // pred_fallthru
      _
    %v73 = vld [vmem:[%s2] sm:$0xf]
    %v74 = vld [vmem:[%s2 + $0x4] sm:$0xf]
    %v75 = vld [vmem:[%s2 + $0x8] sm:$0xf]
    %v76 = vld [vmem:[%s2 + $0xc] sm:$0xf]
    %v77 = vld [vmem:[%s3] sm:$0xf]
    %v78 = vld [vmem:[%s3 + $0x4] sm:$0xf]
    %v79 = vld [vmem:[%s3 + $0x8] sm:$0xf]
    %v80 = vld [vmem:[%s3 + $0xc] sm:$0xf]
    %v81 = vld [vmem:[#allocation5] sm:$0xf]
    %v82 = vld [vmem:[#allocation5 + $0x4] sm:$0xf]
    %v83 = vld [vmem:[#allocation5 + $0x8] sm:$0xf]
    %v84 = vld [vmem:[#allocation5 + $0xc] sm:$0xf]
    %v85 = vld [vmem:[%s8] sm:$0xf]
    %v86 = vld [vmem:[%s8 + $0x4] sm:$0xf]
    %v87 = vld [vmem:[%s8 + $0x8] sm:$0xf]
    %v88 = vld [vmem:[%s8 + $0xc] sm:$0xf]
    %v89 = vld [vmem:[%s8 + $0x10] sm:$0xf]
    %v90 = vld [vmem:[%s8 + $0x14] sm:$0xf]
    %v91 = vld [vmem:[%s8 + $0x18] sm:$0xf]
    %v92 = vld [vmem:[%s8 + $0x1c] sm:$0xf]
    %v93 = vld [vmem:[%s7] sm:$0x1]
    %v94 = vld [vmem:[%s9] sm:$0x1]
    %v95 = vld [vmem:[%s4] sm:$0x1]
    %v96 = vld [vmem:[%s5] sm:$0x1]
    %v97 = vld [vmem:[%s10] sm:$0x1]
    %v98 = vld [vmem:[%s11] sm:$0x1]
    %v99 = vld [vmem:[%s0] sm:$0xff]
    %v100 = vld [vmem:[%s0 + $0x8] sm:$0xff]
    %v101 = vld [vmem:[#allocation2] sm:$0xff]
    %v102 = vpack.c.bf16 %v100, %v99
    %v107 = vunpack.c.l.b16 %v73
    %v108 = vunpack.c.l.b16 %v74
    %v109 = vunpack.c.l.b16 %v75
    %v110 = vunpack.c.l.b16 %v76
    %v111 = vpack.c.b16 %v108, %v107
    %v112 = vpack.c.b16 %v110, %v109
    %vm115 = vcmask 261120
    %v117 = vsel %vm115, %v102, 0
    %119 = vmatpush.bf16.msra.mxu0 0
    %120 = vmatpush.bf16.msra.mxu0 0
    %121 = vmatpush.bf16.msra.mxu0 0
    %122 = vmatpush.bf16.msra.mxu0 0
    %123 = vmatpush.bf16.msra.mxu0 0
    %124 = vmatpush.bf16.msra.mxu0 0
    %125 = vmatpush.bf16.msra.mxu0 %v112
    %126 = vmatpush.bf16.msra.mxu0 %v111
    %127 = vmatmul.bf16.gmra.mxu0 %v117
    %v128 = vpop.f32.mrf.mxu0
    %v129 = vadd.f32 0.0, %v128
    %v130 = vpop.f32.mrf.mxu0
    %v131 = vadd.f32 0.0, %v130
    %132 = vdwg.mxu0
    %v133 = vpack.c.bf16 %v101, %v101
    %v135 = vsel %vm115, %v133, 0
    %137 = vmatpush.bf16.msra.mxu0 0
    %138 = vmatpush.bf16.msra.mxu0 0
    %139 = vmatpush.bf16.msra.mxu0 0
    %140 = vmatpush.bf16.msra.mxu0 0
    %141 = vmatpush.bf16.msra.mxu0 0
    %142 = vmatpush.bf16.msra.mxu0 0
    %143 = vmatpush.bf16.msra.mxu0 %v112
    %144 = vmatpush.bf16.msra.mxu0 %v111
    %145 = vmatmul.bf16.gmra.mxu0 %v135
    %v146 = vpop.f32.mrf.mxu0
    %v147 = vadd.f32 0.0, %v146
    %v148 = vpop.f32.mrf.mxu0
    %149 = vdwg.mxu0
    %v150 = vlaneseq
    %v151 = vshrl.u32 %v150, 7
    %v152 = vlaneseq
    %v153 = vand.u32 %v152, 127
    %vm154 = vcmp.gt.s32.totalorder %v153, %v151
    %v155 = vmul.f32 %v129, 0.25
    %157 = vrot.lane.b32.xlu0 %v147, 96
    %v158 = vpop.permute.xlu0 %157
    %vm159 = vcmask 130048
    %v161 = vsel %vm159, %v155, 0
    %v163 = vsel %vm159, %v158, 0
    %165 = vmatpush.xpose.msra.mxu0 0.0
    %166 = vmatpush.xpose.msra.mxu0 0.0
    %167 = vmatpush.xpose.msra.mxu0 0.0
    %168 = vmatpush.xpose.msra.mxu0 0.0
    %169 = vmatpush.xpose.msra.mxu0 0.0
    %170 = vmatpush.xpose.msra.mxu0 0.0
    %171 = vmatpush.xpose.msra.mxu0 0.0
    %172 = vmatpush.xpose.msra.mxu0 0.0
    %173 = vmatpush.xpose.msra.mxu0 0.0
    %174 = vmatpush.xpose.msra.mxu0 0.0
    %175 = vmatpush.xpose.msra.mxu0 0.0
    %176 = vmatpush.xpose.msra.mxu0 0.0
    %177 = vmatpush.xpose.msra.mxu0 0.0
    %178 = vmatpush.xpose.msra.mxu0 0.0
    %179 = vmatpush.xpose.msra.mxu0 0.0
    %180 = vmatpush.xpose.msra.mxu0 %v163
    %181 = vmatmul.f32.gmra.mxu0 %v161
    %v182 = vpop.f32.mrf.mxu0
    %v183 = vadd.f32 0.0, %v182
    %184 = vdwg.mxu0
    %186 = vrot.lane.b32.xlu0 %v129, 96
    %v187 = vpop.permute.xlu0 %186
    %v188 = vsel %vm159, %v187, 0
    %190 = vmatpush.xpose.msra.mxu0 0.0
    %191 = vmatpush.xpose.msra.mxu0 0.0
    %192 = vmatpush.xpose.msra.mxu0 0.0
    %193 = vmatpush.xpose.msra.mxu0 0.0
    %194 = vmatpush.xpose.msra.mxu0 0.0
    %195 = vmatpush.xpose.msra.mxu0 0.0
    %196 = vmatpush.xpose.msra.mxu0 0.0
    %197 = vmatpush.xpose.msra.mxu0 0.0
    %198 = vmatpush.xpose.msra.mxu0 0.0
    %199 = vmatpush.xpose.msra.mxu0 0.0
    %200 = vmatpush.xpose.msra.mxu0 0.0
    %201 = vmatpush.xpose.msra.mxu0 0.0
    %202 = vmatpush.xpose.msra.mxu0 0.0
    %203 = vmatpush.xpose.msra.mxu0 0.0
    %204 = vmatpush.xpose.msra.mxu0 0.0
    %205 = vmatpush.xpose.msra.mxu0 %v188
    %206 = vmatmul.f32.gmra.mxu0 %v161
    %v207 = vpop.f32.mrf.mxu0
    %v208 = vadd.f32 0.0, %v207
    %209 = vdwg.mxu0
    %v210 = vsel %vm154, -1e+30, %v208
    %vm211 = vcmask 31744
    %v212 = vsel %vm211, %v183, -inf
    %213 = vmax.xlane.f32.xlu0 %v212
    %v214 = vpop.xlane.xlu0 %213
    %vm215 = vcmask 64512
    %v216 = vsel %vm215, %v210, -inf
    %217 = vmax.xlane.f32.xlu0 %v216
    %v218 = vpop.xlane.xlu0 %217
    %v219 = vmax.f32 %v214, %v218
    %v220 = vsub.f32 %v183, %v219
    %v221 = vmul.f32 %v220, 1.442695
    %v222 = vpow.pop %v221
    %v223 = vsub.f32 %v210, %v219
    %v224 = vmul.f32 %v223, 1.442695
    %v225 = vpow.pop %v224
    %v226 = vsel %vm211, %v222, 0.0
    %227 = vadd.xlane.f32.xlu0 %v226
    %v228 = vpop.xlane.xlu0 %227
    %v229 = vsel %vm215, %v225, 0.0
    %230 = vadd.xlane.f32.xlu0 %v229
    %v231 = vpop.xlane.xlu0 %230
    %v232 = vadd.f32 %v228, %v231
    %v233 = vrcp.pop %v232
    %234 = vrot.lane.b32.xlu0 %v129, 64
    %v235 = vpop.permute.xlu0 %234
    %v238 = vsel %vm215, %v225, 0
    %240 = vmatpush.msra.mxu0 0.0
    %241 = vmatpush.msra.mxu0 0.0
    %242 = vmatpush.msra.mxu0 0.0
    %243 = vmatpush.msra.mxu0 0.0
    %244 = vmatpush.msra.mxu0 0.0
    %245 = vmatpush.msra.mxu0 0.0
    %246 = vmatpush.msra.mxu0 0.0
    %247 = vmatpush.msra.mxu0 0.0
    %248 = vmatpush.msra.mxu0 0.0
    %249 = vmatpush.msra.mxu0 0.0
    %250 = vmatpush.msra.mxu0 0.0
    %251 = vmatpush.msra.mxu0 0.0
    %252 = vmatpush.msra.mxu0 0.0
    %253 = vmatpush.msra.mxu0 0.0
    %254 = vmatpush.msra.mxu0 0.0
    %255 = vmatpush.msra.mxu0 %v235
    %256 = vmatmul.f32.gmra.mxu0 %v238
    %v257 = vpop.f32.mrf.mxu0
    %v258 = vadd.f32 0.0, %v257
    %259 = vdwg.mxu0
    %260 = vrot.lane.b32.xlu0 %v147, 64
    %v261 = vpop.permute.xlu0 %260
    %v263 = vsel %vm211, %v222, 0
    %vm265 = vcmask 1043456
    %v266 = vsel %vm265, %v261, 0
    %268 = vmatpush.msra.mxu0 0.0
    %269 = vmatpush.msra.mxu0 0.0
    %270 = vmatpush.msra.mxu0 0.0
    %271 = vmatpush.msra.mxu0 0.0
    %272 = vmatpush.msra.mxu0 0.0
    %273 = vmatpush.msra.mxu0 0.0
    %274 = vmatpush.msra.mxu0 0.0
    %275 = vmatpush.msra.mxu0 0.0
    %276 = vmatpush.msra.mxu0 0.0
    %277 = vmatpush.msra.mxu0 0.0
    %278 = vmatpush.msra.mxu0 0.0
    %279 = vmatpush.msra.mxu0 0.0
    %280 = vmatpush.msra.mxu0 0.0
    %281 = vmatpush.msra.mxu0 0.0
    %282 = vmatpush.msra.mxu0 0.0
    %283 = vmatpush.msra.mxu0 %v266
    %284 = vmatmul.f32.gmra.mxu0 %v263
    %v285 = vpop.f32.mrf.mxu0
    %v286 = vadd.f32 %v258, %v285
    %287 = vdwg.mxu0
    %v288 = vmul.f32 %v286, %v233
    %v289 = vpack.c.bf16 %v288, %v288
    %290 = vrot.lane.b32.xlu0 %v155, 112
    %v291 = vpop.permute.xlu0 %290
    %292 = vrot.lane.b32.xlu0 %v147, 80
    %v293 = vpop.permute.xlu0 %292
    %v294 = vsel %vm159, %v291, 0
    %v296 = vsel %vm159, %v293, 0
    %298 = vmatpush.xpose.msra.mxu0 0.0
    %299 = vmatpush.xpose.msra.mxu0 0.0
    %300 = vmatpush.xpose.msra.mxu0 0.0
    %301 = vmatpush.xpose.msra.mxu0 0.0
    %302 = vmatpush.xpose.msra.mxu0 0.0
    %303 = vmatpush.xpose.msra.mxu0 0.0
    %304 = vmatpush.xpose.msra.mxu0 0.0
    %305 = vmatpush.xpose.msra.mxu0 0.0
    %306 = vmatpush.xpose.msra.mxu0 0.0
    %307 = vmatpush.xpose.msra.mxu0 0.0
    %308 = vmatpush.xpose.msra.mxu0 0.0
    %309 = vmatpush.xpose.msra.mxu0 0.0
    %310 = vmatpush.xpose.msra.mxu0 0.0
    %311 = vmatpush.xpose.msra.mxu0 0.0
    %312 = vmatpush.xpose.msra.mxu0 0.0
    %313 = vmatpush.xpose.msra.mxu0 %v296
    %314 = vmatmul.f32.gmra.mxu0 %v294
    %v315 = vpop.f32.mrf.mxu0
    %v316 = vadd.f32 0.0, %v315
    %317 = vdwg.mxu0
    %318 = vrot.lane.b32.xlu0 %v129, 80
    %v319 = vpop.permute.xlu0 %318
    %v320 = vsel %vm159, %v319, 0
    %322 = vmatpush.xpose.msra.mxu0 0.0
    %323 = vmatpush.xpose.msra.mxu0 0.0
    %324 = vmatpush.xpose.msra.mxu0 0.0
    %325 = vmatpush.xpose.msra.mxu0 0.0
    %326 = vmatpush.xpose.msra.mxu0 0.0
    %327 = vmatpush.xpose.msra.mxu0 0.0
    %328 = vmatpush.xpose.msra.mxu0 0.0
    %329 = vmatpush.xpose.msra.mxu0 0.0
    %330 = vmatpush.xpose.msra.mxu0 0.0
    %331 = vmatpush.xpose.msra.mxu0 0.0
    %332 = vmatpush.xpose.msra.mxu0 0.0
    %333 = vmatpush.xpose.msra.mxu0 0.0
    %334 = vmatpush.xpose.msra.mxu0 0.0
    %335 = vmatpush.xpose.msra.mxu0 0.0
    %336 = vmatpush.xpose.msra.mxu0 0.0
    %337 = vmatpush.xpose.msra.mxu0 %v320
    %338 = vmatmul.f32.gmra.mxu0 %v294
    %v339 = vpop.f32.mrf.mxu0
    %v340 = vadd.f32 0.0, %v339
    %341 = vdwg.mxu0
    %v342 = vsel %vm154, -1e+30, %v340
    %v343 = vsel %vm211, %v316, -inf
    %344 = vmax.xlane.f32.xlu0 %v343
    %v345 = vpop.xlane.xlu0 %344
    %v346 = vsel %vm215, %v342, -inf
    %347 = vmax.xlane.f32.xlu0 %v346
    %v348 = vpop.xlane.xlu0 %347
    %v349 = vmax.f32 %v345, %v348
    %v350 = vsub.f32 %v316, %v349
    %v351 = vmul.f32 %v350, 1.442695
    %v352 = vpow.pop %v351
    %v353 = vsub.f32 %v342, %v349
    %v354 = vmul.f32 %v353, 1.442695
    %v355 = vpow.pop %v354
    %v356 = vsel %vm211, %v352, 0.0
    %357 = vadd.xlane.f32.xlu0 %v356
    %v358 = vpop.xlane.xlu0 %357
    %v359 = vsel %vm215, %v355, 0.0
    %360 = vadd.xlane.f32.xlu0 %v359
    %v361 = vpop.xlane.xlu0 %360
    %v362 = vadd.f32 %v358, %v361
    %v363 = vrcp.pop %v362
    %364 = vrot.lane.b32.xlu0 %v129, 48
    %v365 = vpop.permute.xlu0 %364
    %v368 = vsel %vm215, %v355, 0
    %370 = vmatpush.msra.mxu0 0.0
    %371 = vmatpush.msra.mxu0 0.0
    %372 = vmatpush.msra.mxu0 0.0
    %373 = vmatpush.msra.mxu0 0.0
    %374 = vmatpush.msra.mxu0 0.0
    %375 = vmatpush.msra.mxu0 0.0
    %376 = vmatpush.msra.mxu0 0.0
    %377 = vmatpush.msra.mxu0 0.0
    %378 = vmatpush.msra.mxu0 0.0
    %379 = vmatpush.msra.mxu0 0.0
    %380 = vmatpush.msra.mxu0 0.0
    %381 = vmatpush.msra.mxu0 0.0
    %382 = vmatpush.msra.mxu0 0.0
    %383 = vmatpush.msra.mxu0 0.0
    %384 = vmatpush.msra.mxu0 0.0
    %385 = vmatpush.msra.mxu0 %v365
    %386 = vmatmul.f32.gmra.mxu0 %v368
    %v387 = vpop.f32.mrf.mxu0
    %v388 = vadd.f32 0.0, %v387
    %389 = vdwg.mxu0
    %390 = vrot.lane.b32.xlu0 %v147, 48
    %v391 = vpop.permute.xlu0 %390
    %v393 = vsel %vm211, %v352, 0
    %v395 = vsel %vm265, %v391, 0
    %397 = vmatpush.msra.mxu0 0.0
    %398 = vmatpush.msra.mxu0 0.0
    %399 = vmatpush.msra.mxu0 0.0
    %400 = vmatpush.msra.mxu0 0.0
    %401 = vmatpush.msra.mxu0 0.0
    %402 = vmatpush.msra.mxu0 0.0
    %403 = vmatpush.msra.mxu0 0.0
    %404 = vmatpush.msra.mxu0 0.0
    %405 = vmatpush.msra.mxu0 0.0
    %406 = vmatpush.msra.mxu0 0.0
    %407 = vmatpush.msra.mxu0 0.0
    %408 = vmatpush.msra.mxu0 0.0
    %409 = vmatpush.msra.mxu0 0.0
    %410 = vmatpush.msra.mxu0 0.0
    %411 = vmatpush.msra.mxu0 0.0
    %412 = vmatpush.msra.mxu0 %v395
    %413 = vmatmul.f32.gmra.mxu0 %v393
    %v414 = vpop.f32.mrf.mxu0
    %v415 = vadd.f32 %v388, %v414
    %416 = vdwg.mxu0
    %v417 = vmul.f32 %v415, %v363
    %v418 = vpack.c.bf16 %v417, %v417
    %v421 = vunpack.c.l.b16 %v79
    %v422 = vunpack.c.l.b16 %v80
    %v423 = vpack.c.b16 %v422, %v421
    %v426 = vsel %vm159, %v418, 0
    %428 = vmatpush.bf16.msra.mxu0 0
    %429 = vmatpush.bf16.msra.mxu0 0
    %430 = vmatpush.bf16.msra.mxu0 0
    %431 = vmatpush.bf16.msra.mxu0 0
    %432 = vmatpush.bf16.msra.mxu0 0
    %433 = vmatpush.bf16.msra.mxu0 0
    %434 = vmatpush.bf16.msra.mxu0 0
    %435 = vmatpush.bf16.msra.mxu0 %v423
    %436 = vmatmul.bf16.gmra.mxu0 %v426
    %v437 = vpop.f32.mrf.mxu0
    %v438 = vadd.f32 0.0, %v437
    %v439 = vpop.f32.mrf.mxu0
    %440 = vdwg.mxu0
    %v443 = vunpack.c.l.b16 %v77
    %v444 = vunpack.c.l.b16 %v78
    %v445 = vpack.c.b16 %v444, %v443
    %v448 = vsel %vm159, %v289, 0
    %450 = vmatpush.bf16.msra.mxu0 0
    %451 = vmatpush.bf16.msra.mxu0 0
    %452 = vmatpush.bf16.msra.mxu0 0
    %453 = vmatpush.bf16.msra.mxu0 0
    %454 = vmatpush.bf16.msra.mxu0 0
    %455 = vmatpush.bf16.msra.mxu0 0
    %456 = vmatpush.bf16.msra.mxu0 0
    %457 = vmatpush.bf16.msra.mxu0 %v445
    %458 = vmatmul.bf16.gmra.mxu0 %v448
    %v459 = vpop.f32.mrf.mxu0
    %v460 = vadd.f32 %v438, %v459
    %v461 = vpop.f32.mrf.mxu0
    %462 = vdwg.mxu0
    %v463 = vmul.f32 %v131, 0.25
    %v464 = vrot.slane %v147, 4
    %465 = vrot.lane.b32.xlu0 %v464, 96
    %v466 = vpop.permute.xlu0 %465
    %v468 = vsel %vm159, %v463, 0
    %v470 = vsel %vm159, %v466, 0
    %472 = vmatpush.xpose.msra.mxu0 0.0
    %473 = vmatpush.xpose.msra.mxu0 0.0
    %474 = vmatpush.xpose.msra.mxu0 0.0
    %475 = vmatpush.xpose.msra.mxu0 0.0
    %476 = vmatpush.xpose.msra.mxu0 0.0
    %477 = vmatpush.xpose.msra.mxu0 0.0
    %478 = vmatpush.xpose.msra.mxu0 0.0
    %479 = vmatpush.xpose.msra.mxu0 0.0
    %480 = vmatpush.xpose.msra.mxu0 0.0
    %481 = vmatpush.xpose.msra.mxu0 0.0
    %482 = vmatpush.xpose.msra.mxu0 0.0
    %483 = vmatpush.xpose.msra.mxu0 0.0
    %484 = vmatpush.xpose.msra.mxu0 0.0
    %485 = vmatpush.xpose.msra.mxu0 0.0
    %486 = vmatpush.xpose.msra.mxu0 0.0
    %487 = vmatpush.xpose.msra.mxu0 %v470
    %488 = vmatmul.f32.gmra.mxu0 %v468
    %v489 = vpop.f32.mrf.mxu0
    %v490 = vadd.f32 0.0, %v489
    %491 = vdwg.mxu0
    %493 = vrot.lane.b32.xlu0 %v131, 96
    %v494 = vpop.permute.xlu0 %493
    %v495 = vsel %vm159, %v494, 0
    %497 = vmatpush.xpose.msra.mxu0 0.0
    %498 = vmatpush.xpose.msra.mxu0 0.0
    %499 = vmatpush.xpose.msra.mxu0 0.0
    %500 = vmatpush.xpose.msra.mxu0 0.0
    %501 = vmatpush.xpose.msra.mxu0 0.0
    %502 = vmatpush.xpose.msra.mxu0 0.0
    %503 = vmatpush.xpose.msra.mxu0 0.0
    %504 = vmatpush.xpose.msra.mxu0 0.0
    %505 = vmatpush.xpose.msra.mxu0 0.0
    %506 = vmatpush.xpose.msra.mxu0 0.0
    %507 = vmatpush.xpose.msra.mxu0 0.0
    %508 = vmatpush.xpose.msra.mxu0 0.0
    %509 = vmatpush.xpose.msra.mxu0 0.0
    %510 = vmatpush.xpose.msra.mxu0 0.0
    %511 = vmatpush.xpose.msra.mxu0 0.0
    %512 = vmatpush.xpose.msra.mxu0 %v495
    %513 = vmatmul.f32.gmra.mxu0 %v468
    %v514 = vpop.f32.mrf.mxu0
    %v515 = vadd.f32 0.0, %v514
    %516 = vdwg.mxu0
    %v517 = vsel %vm154, -1e+30, %v515
    %v518 = vsel %vm211, %v490, -inf
    %519 = vmax.xlane.f32.xlu0 %v518
    %v520 = vpop.xlane.xlu0 %519
    %v521 = vsel %vm215, %v517, -inf
    %522 = vmax.xlane.f32.xlu0 %v521
    %v523 = vpop.xlane.xlu0 %522
    %v524 = vmax.f32 %v520, %v523
    %v525 = vsub.f32 %v490, %v524
    %v526 = vmul.f32 %v525, 1.442695
    %v527 = vpow.pop %v526
    %v528 = vsub.f32 %v517, %v524
    %v529 = vmul.f32 %v528, 1.442695
    %v530 = vpow.pop %v529
    %v531 = vsel %vm211, %v527, 0.0
    %532 = vadd.xlane.f32.xlu0 %v531
    %v533 = vpop.xlane.xlu0 %532
    %v534 = vsel %vm215, %v530, 0.0
    %535 = vadd.xlane.f32.xlu0 %v534
    %v536 = vpop.xlane.xlu0 %535
    %v537 = vadd.f32 %v533, %v536
    %v538 = vrcp.pop %v537
    %539 = vrot.lane.b32.xlu0 %v131, 64
    %v540 = vpop.permute.xlu0 %539
    %v543 = vsel %vm215, %v530, 0
    %545 = vmatpush.msra.mxu0 0.0
    %546 = vmatpush.msra.mxu0 0.0
    %547 = vmatpush.msra.mxu0 0.0
    %548 = vmatpush.msra.mxu0 0.0
    %549 = vmatpush.msra.mxu0 0.0
    %550 = vmatpush.msra.mxu0 0.0
    %551 = vmatpush.msra.mxu0 0.0
    %552 = vmatpush.msra.mxu0 0.0
    %553 = vmatpush.msra.mxu0 0.0
    %554 = vmatpush.msra.mxu0 0.0
    %555 = vmatpush.msra.mxu0 0.0
    %556 = vmatpush.msra.mxu0 0.0
    %557 = vmatpush.msra.mxu0 0.0
    %558 = vmatpush.msra.mxu0 0.0
    %559 = vmatpush.msra.mxu0 0.0
    %560 = vmatpush.msra.mxu0 %v540
    %561 = vmatmul.f32.gmra.mxu0 %v543
    %v562 = vpop.f32.mrf.mxu0
    %v563 = vadd.f32 0.0, %v562
    %564 = vdwg.mxu0
    %565 = vrot.lane.b32.xlu0 %v464, 64
    %v566 = vpop.permute.xlu0 %565
    %v568 = vsel %vm211, %v527, 0
    %v570 = vsel %vm265, %v566, 0
    %572 = vmatpush.msra.mxu0 0.0
    %573 = vmatpush.msra.mxu0 0.0
    %574 = vmatpush.msra.mxu0 0.0
    %575 = vmatpush.msra.mxu0 0.0
    %576 = vmatpush.msra.mxu0 0.0
    %577 = vmatpush.msra.mxu0 0.0
    %578 = vmatpush.msra.mxu0 0.0
    %579 = vmatpush.msra.mxu0 0.0
    %580 = vmatpush.msra.mxu0 0.0
    %581 = vmatpush.msra.mxu0 0.0
    %582 = vmatpush.msra.mxu0 0.0
    %583 = vmatpush.msra.mxu0 0.0
    %584 = vmatpush.msra.mxu0 0.0
    %585 = vmatpush.msra.mxu0 0.0
    %586 = vmatpush.msra.mxu0 0.0
    %587 = vmatpush.msra.mxu0 %v570
    %588 = vmatmul.f32.gmra.mxu0 %v568
    %v589 = vpop.f32.mrf.mxu0
    %v590 = vadd.f32 %v563, %v589
    %591 = vdwg.mxu0
    %v592 = vmul.f32 %v590, %v538
    %v593 = vpack.c.bf16 %v592, %v592
    %594 = vrot.lane.b32.xlu0 %v463, 112
    %v595 = vpop.permute.xlu0 %594
    %596 = vrot.lane.b32.xlu0 %v464, 80
    %v597 = vpop.permute.xlu0 %596
    %v598 = vsel %vm159, %v595, 0
    %v600 = vsel %vm159, %v597, 0
    %602 = vmatpush.xpose.msra.mxu0 0.0
    %603 = vmatpush.xpose.msra.mxu0 0.0
    %604 = vmatpush.xpose.msra.mxu0 0.0
    %605 = vmatpush.xpose.msra.mxu0 0.0
    %606 = vmatpush.xpose.msra.mxu0 0.0
    %607 = vmatpush.xpose.msra.mxu0 0.0
    %608 = vmatpush.xpose.msra.mxu0 0.0
    %609 = vmatpush.xpose.msra.mxu0 0.0
    %610 = vmatpush.xpose.msra.mxu0 0.0
    %611 = vmatpush.xpose.msra.mxu0 0.0
    %612 = vmatpush.xpose.msra.mxu0 0.0
    %613 = vmatpush.xpose.msra.mxu0 0.0
    %614 = vmatpush.xpose.msra.mxu0 0.0
    %615 = vmatpush.xpose.msra.mxu0 0.0
    %616 = vmatpush.xpose.msra.mxu0 0.0
    %617 = vmatpush.xpose.msra.mxu0 %v600
    %618 = vmatmul.f32.gmra.mxu0 %v598
    %v619 = vpop.f32.mrf.mxu0
    %v620 = vadd.f32 0.0, %v619
    %621 = vdwg.mxu0
    %622 = vrot.lane.b32.xlu0 %v131, 80
    %v623 = vpop.permute.xlu0 %622
    %v624 = vsel %vm159, %v623, 0
    %626 = vmatpush.xpose.msra.mxu0 0.0
    %627 = vmatpush.xpose.msra.mxu0 0.0
    %628 = vmatpush.xpose.msra.mxu0 0.0
    %629 = vmatpush.xpose.msra.mxu0 0.0
    %630 = vmatpush.xpose.msra.mxu0 0.0
    %631 = vmatpush.xpose.msra.mxu0 0.0
    %632 = vmatpush.xpose.msra.mxu0 0.0
    %633 = vmatpush.xpose.msra.mxu0 0.0
    %634 = vmatpush.xpose.msra.mxu0 0.0
    %635 = vmatpush.xpose.msra.mxu0 0.0
    %636 = vmatpush.xpose.msra.mxu0 0.0
    %637 = vmatpush.xpose.msra.mxu0 0.0
    %638 = vmatpush.xpose.msra.mxu0 0.0
    %639 = vmatpush.xpose.msra.mxu0 0.0
    %640 = vmatpush.xpose.msra.mxu0 0.0
    %641 = vmatpush.xpose.msra.mxu0 %v624
    %642 = vmatmul.f32.gmra.mxu0 %v598
    %v643 = vpop.f32.mrf.mxu0
    %v644 = vadd.f32 0.0, %v643
    %645 = vdwg.mxu0
    %v646 = vsel %vm154, -1e+30, %v644
    %v647 = vsel %vm211, %v620, -inf
    %648 = vmax.xlane.f32.xlu0 %v647
    %v649 = vpop.xlane.xlu0 %648
    %v650 = vsel %vm215, %v646, -inf
    %651 = vmax.xlane.f32.xlu0 %v650
    %v652 = vpop.xlane.xlu0 %651
    %v653 = vmax.f32 %v649, %v652
    %v654 = vsub.f32 %v620, %v653
    %v655 = vmul.f32 %v654, 1.442695
    %v656 = vpow.pop %v655
    %v657 = vsub.f32 %v646, %v653
    %v658 = vmul.f32 %v657, 1.442695
    %v659 = vpow.pop %v658
    %v660 = vsel %vm211, %v656, 0.0
    %661 = vadd.xlane.f32.xlu0 %v660
    %v662 = vpop.xlane.xlu0 %661
    %v663 = vsel %vm215, %v659, 0.0
    %664 = vadd.xlane.f32.xlu0 %v663
    %v665 = vpop.xlane.xlu0 %664
    %v666 = vadd.f32 %v662, %v665
    %v667 = vrcp.pop %v666
    %668 = vrot.lane.b32.xlu0 %v131, 48
    %v669 = vpop.permute.xlu0 %668
    %v672 = vsel %vm215, %v659, 0
    %674 = vmatpush.msra.mxu0 0.0
    %675 = vmatpush.msra.mxu0 0.0
    %676 = vmatpush.msra.mxu0 0.0
    %677 = vmatpush.msra.mxu0 0.0
    %678 = vmatpush.msra.mxu0 0.0
    %679 = vmatpush.msra.mxu0 0.0
    %680 = vmatpush.msra.mxu0 0.0
    %681 = vmatpush.msra.mxu0 0.0
    %682 = vmatpush.msra.mxu0 0.0
    %683 = vmatpush.msra.mxu0 0.0
    %684 = vmatpush.msra.mxu0 0.0
    %685 = vmatpush.msra.mxu0 0.0
    %686 = vmatpush.msra.mxu0 0.0
    %687 = vmatpush.msra.mxu0 0.0
    %688 = vmatpush.msra.mxu0 0.0
    %689 = vmatpush.msra.mxu0 %v669
    %690 = vmatmul.f32.gmra.mxu0 %v672
    %v691 = vpop.f32.mrf.mxu0
    %v692 = vadd.f32 0.0, %v691
    %693 = vdwg.mxu0
    %694 = vrot.lane.b32.xlu0 %v464, 48
    %v695 = vpop.permute.xlu0 %694
    %v697 = vsel %vm211, %v656, 0
    %v699 = vsel %vm265, %v695, 0
    %701 = vmatpush.msra.mxu0 0.0
    %702 = vmatpush.msra.mxu0 0.0
    %703 = vmatpush.msra.mxu0 0.0
    %704 = vmatpush.msra.mxu0 0.0
    %705 = vmatpush.msra.mxu0 0.0
    %706 = vmatpush.msra.mxu0 0.0
    %707 = vmatpush.msra.mxu0 0.0
    %708 = vmatpush.msra.mxu0 0.0
    %709 = vmatpush.msra.mxu0 0.0
    %710 = vmatpush.msra.mxu0 0.0
    %711 = vmatpush.msra.mxu0 0.0
    %712 = vmatpush.msra.mxu0 0.0
    %713 = vmatpush.msra.mxu0 0.0
    %714 = vmatpush.msra.mxu0 0.0
    %715 = vmatpush.msra.mxu0 0.0
    %716 = vmatpush.msra.mxu0 %v699
    %717 = vmatmul.f32.gmra.mxu0 %v697
    %v718 = vpop.f32.mrf.mxu0
    %v719 = vadd.f32 %v692, %v718
    %720 = vdwg.mxu0
    %v721 = vmul.f32 %v719, %v667
    %v722 = vpack.c.bf16 %v721, %v721
    %v724 = vsel %vm159, %v722, 0
    %726 = vmatpush.bf16.msra.mxu0 0
    %727 = vmatpush.bf16.msra.mxu0 0
    %728 = vmatpush.bf16.msra.mxu0 0
    %729 = vmatpush.bf16.msra.mxu0 0
    %730 = vmatpush.bf16.msra.mxu0 0
    %731 = vmatpush.bf16.msra.mxu0 0
    %732 = vmatpush.bf16.msra.mxu0 0
    %733 = vmatpush.bf16.msra.mxu0 %v423
    %734 = vmatmul.bf16.gmra.mxu0 %v724
    %v735 = vpop.f32.mrf.mxu0
    %v736 = vadd.f32 0.0, %v735
    %v737 = vpop.f32.mrf.mxu0
    %738 = vdwg.mxu0
    %v740 = vsel %vm159, %v593, 0
    %742 = vmatpush.bf16.msra.mxu0 0
    %743 = vmatpush.bf16.msra.mxu0 0
    %744 = vmatpush.bf16.msra.mxu0 0
    %745 = vmatpush.bf16.msra.mxu0 0
    %746 = vmatpush.bf16.msra.mxu0 0
    %747 = vmatpush.bf16.msra.mxu0 0
    %748 = vmatpush.bf16.msra.mxu0 0
    %749 = vmatpush.bf16.msra.mxu0 %v445
    %750 = vmatmul.bf16.gmra.mxu0 %v740
    %v751 = vpop.f32.mrf.mxu0
    %v752 = vadd.f32 %v736, %v751
    %v753 = vpop.f32.mrf.mxu0
    %754 = vdwg.mxu0
    %v755 = vadd.f32 %v99, %v460
    %v756 = vadd.f32 %v100, %v752
    %v757 = vsel %vm115, %v755, 0.0
    %758 = vadd.xlane.f32.xlu0 %v757
    %v759 = vpop.xlane.xlu0 %758
    %v760 = vsel %vm115, %v756, 0.0
    %761 = vadd.xlane.f32.xlu0 %v760
    %v762 = vpop.xlane.xlu0 %761
    %v763 = vrcp.pop 32.0
    %v764 = vmul.f32 32.0, %v763
    %v765 = vsub.f32 1.0, %v764
    %v766 = vmul.f32 %v763, %v765
    %v767 = vadd.f32 %v763, %v766
    %vm768 = vweird.f32 %v763
    %v769 = vsel %vm768, %v763, %v767
    %v770 = vmul.f32 %v759, %v769
    %v771 = vmul.f32 %v762, %v769
    %v772 = vsub.f32 %v755, %v770
    %v773 = vsub.f32 %v756, %v771
    %v774 = vmul.f32 %v772, %v772
    %v775 = vmul.f32 %v773, %v773
    %v776 = vsel %vm115, %v774, 0.0
    %777 = vadd.xlane.f32.xlu0 %v776
    %v778 = vpop.xlane.xlu0 %777
    %v779 = vsel %vm115, %v775, 0.0
    %780 = vadd.xlane.f32.xlu0 %v779
    %v781 = vpop.xlane.xlu0 %780
    %v782 = vmul.f32 %v778, %v769
    %v783 = vmul.f32 %v781, %v769
    %v784 = vadd.f32 %v782, 1e-05
    %v785 = vadd.f32 %v783, 1e-05
    %v786 = vrsqrt.pop %v784
    %v787 = vmul.f32 %v786, %v784
    %v788 = vmul.f32 %v787, %v786
    %v789 = vmul.f32 0.5, %v788
    %v790 = vsub.f32 1.5, %v789
    %v791 = vmul.f32 %v786, %v790
    %vm792 = vweird.f32 %v784
    %vm793 = vweird.f32 %v786
    %vm794 = vmor %vm792, %vm793
    %v795 = vsel %vm794, %v786, %v791
    %v796 = vrsqrt.pop %v785
    %v797 = vmul.f32 %v796, %v785
    %v798 = vmul.f32 %v797, %v796
    %v799 = vmul.f32 0.5, %v798
    %v800 = vsub.f32 1.5, %v799
    %v801 = vmul.f32 %v796, %v800
    %vm802 = vweird.f32 %v785
    %vm803 = vweird.f32 %v796
    %vm804 = vmor %vm802, %vm803
    %v805 = vsel %vm804, %v796, %v801
    %v806 = vmul.f32 %v772, %v795
    %v807 = vmul.f32 %v773, %v805
    %v809 = vperm.slane %v95, 0
    %v811 = vmul.f32 %v806, %v809
    %v812 = vmul.f32 %v807, %v809
    %v814 = vperm.slane %v96, 0
    %v816 = vadd.f32 %v811, %v814
    %v817 = vadd.f32 %v812, %v814
    %v818 = vpack.c.bf16 %v817, %v816
    %v820 = vperm.slane %v93, 0
    %v826 = vunpack.c.l.b16 %v81
    %v827 = vunpack.c.l.b16 %v82
    %v828 = vunpack.c.l.b16 %v83
    %v829 = vunpack.c.l.b16 %v84
    %v830 = vpack.c.b16 %v827, %v826
    %v831 = vpack.c.b16 %v829, %v828
    %v835 = vsel %vm115, %v818, 0
    %837 = vmatpush.bf16.msra.mxu0 0
    %838 = vmatpush.bf16.msra.mxu0 0
    %839 = vmatpush.bf16.msra.mxu0 0
    %840 = vmatpush.bf16.msra.mxu0 0
    %841 = vmatpush.bf16.msra.mxu0 0
    %842 = vmatpush.bf16.msra.mxu0 0
    %843 = vmatpush.bf16.msra.mxu0 %v831
    %844 = vmatpush.bf16.msra.mxu0 %v830
    %845 = vmatmul.bf16.gmra.mxu0 %v835
    %v846 = vpop.f32.mrf.mxu0
    %v847 = vadd.f32 %v820, %v846
    %v848 = vpop.f32.mrf.mxu0
    %v849 = vadd.f32 %v820, %v848
    %850 = vdwg.mxu0
    %v851 = vmax.f32 %v847, 0.0
    %v852 = vmax.f32 %v849, 0.0
    %v853 = vpack.c.bf16 %v852, %v851
    %v855 = vperm.slane %v94, 0
    %v865 = vunpack.c.l.b16 %v85
    %v866 = vunpack.c.l.b16 %v86
    %v867 = vunpack.c.l.b16 %v87
    %v868 = vunpack.c.l.b16 %v88
    %v869 = vunpack.c.l.b16 %v89
    %v870 = vunpack.c.l.b16 %v90
    %v871 = vunpack.c.l.b16 %v91
    %v872 = vunpack.c.l.b16 %v92
    %v873 = vpack.c.b16 %v866, %v865
    %v874 = vpack.c.b16 %v868, %v867
    %v875 = vpack.c.b16 %v870, %v869
    %v876 = vpack.c.b16 %v872, %v871
    %vm881 = vcmask 523264
    %v883 = vsel %vm881, %v853, 0
    %885 = vmatpush.bf16.msra.mxu0 0
    %886 = vmatpush.bf16.msra.mxu0 0
    %887 = vmatpush.bf16.msra.mxu0 0
    %888 = vmatpush.bf16.msra.mxu0 0
    %889 = vmatpush.bf16.msra.mxu0 %v876
    %890 = vmatpush.bf16.msra.mxu0 %v875
    %891 = vmatpush.bf16.msra.mxu0 %v874
    %892 = vmatpush.bf16.msra.mxu0 %v873
    %893 = vmatmul.bf16.gmra.mxu0 %v883
    %v894 = vpop.f32.mrf.mxu0
    %v895 = vadd.f32 %v855, %v894
    %v896 = vpop.f32.mrf.mxu0
    %v897 = vadd.f32 %v855, %v896
    %898 = vdwg.mxu0
    %v899 = vadd.f32 %v816, %v895
    %v900 = vadd.f32 %v817, %v897
    %v901 = vsel %vm115, %v899, 0.0
    %902 = vadd.xlane.f32.xlu0 %v901
    %v903 = vpop.xlane.xlu0 %902
    %v904 = vsel %vm115, %v900, 0.0
    %905 = vadd.xlane.f32.xlu0 %v904
    %v906 = vpop.xlane.xlu0 %905
    %v907 = vmul.f32 %v903, %v769
    %v908 = vmul.f32 %v906, %v769
    %v909 = vsub.f32 %v899, %v907
    %v910 = vsub.f32 %v900, %v908
    %v911 = vmul.f32 %v909, %v909
    %v912 = vmul.f32 %v910, %v910
    %v913 = vsel %vm115, %v911, 0.0
    %914 = vadd.xlane.f32.xlu0 %v913
    %v915 = vpop.xlane.xlu0 %914
    %v916 = vsel %vm115, %v912, 0.0
    %917 = vadd.xlane.f32.xlu0 %v916
    %v918 = vpop.xlane.xlu0 %917
    %v919 = vmul.f32 %v915, %v769
    %v920 = vmul.f32 %v918, %v769
    %v921 = vadd.f32 %v919, 1e-05
    %v922 = vadd.f32 %v920, 1e-05
    %v923 = vrsqrt.pop %v921
    %v924 = vmul.f32 %v923, %v921
    %v925 = vmul.f32 %v924, %v923
    %v926 = vmul.f32 0.5, %v925
    %v927 = vsub.f32 1.5, %v926
    %v928 = vmul.f32 %v923, %v927
    %vm929 = vweird.f32 %v921
    %vm930 = vweird.f32 %v923
    %vm931 = vmor %vm929, %vm930
    %v932 = vsel %vm931, %v923, %v928
    %v933 = vrsqrt.pop %v922
    %v934 = vmul.f32 %v933, %v922
    %v935 = vmul.f32 %v934, %v933
    %v936 = vmul.f32 0.5, %v935
    %v937 = vsub.f32 1.5, %v936
    %v938 = vmul.f32 %v933, %v937
    %vm939 = vweird.f32 %v922
    %vm940 = vweird.f32 %v933
    %vm941 = vmor %vm939, %vm940
    %v942 = vsel %vm941, %v933, %v938
    %v943 = vmul.f32 %v909, %v932
    %v944 = vmul.f32 %v910, %v942
    %v946 = vperm.slane %v97, 0
    %v948 = vmul.f32 %v943, %v946
    %v949 = vmul.f32 %v944, %v946
    %v951 = vperm.slane %v98, 0
    %v953 = vadd.f32 %v948, %v951
    %v954 = vadd.f32 %v949, %v951
    %955 = vst.msk [vmem:[#allocation7] sm:$0xff] %vm115, %v953
    %956 = vst.msk [vmem:[#allocation7 + $0x8] sm:$0xff] %vm115, %v954
    // Predicated region
    $region58: #{tpu_custom_call.1} parent=1 // pred_check
      _
    $region59: #{tpu_custom_call.1} parent=1 // pred_check_branch
      %958 = sbr.rel (0) target = $region61
    $region60: #{tpu_custom_call.1} parent=1 // pred_region
      %960 = vsyncadd [#allocation4], 0
      %s961 = sshll.u32 [#allocation7], 4
      %s962 = int_to_ptr.vmem [resolvable:$true] %s961
      %s963 = sshll.u32 %s12, 4
      %s964 = int_to_ptr.hbm [resolvable:$true] %s963
      %969 = dma.vmem_to_hbm [thread:$0]  %s962, 256, %s964, [#allocation4], 128, 128, 8
    $region61: #{tpu_custom_call.1} parent=1 // pred_fallthru
      _
    // Predicated region
    $region62: #{tpu_custom_call.1} parent=1 // pred_check
      _
    $region63: #{tpu_custom_call.1} parent=1 // pred_check_branch
      %971 = sbr.rel (0) target = $region65
    $region64: #{tpu_custom_call.1} parent=1 // pred_region
      %973 = dma.done [#allocation4], 256
    $region65: #{tpu_custom_call.1} parent=1 // pred_fallthru
      _
    %974 = vsyncpa [#allocation3], 1
    %975 = vsyncpa [#allocation6], 1
    %976 = vsyncpa [#allocation4], 1

</llo_original>
